<compile_context>
chip_gen: v7x
topology: tpu7x:2x2x1
jax: 0.10.0
libtpu: 0.0.40
codegen_flags: <defaults>
</compile_context>

<pallas_src>
import jax
import jax.numpy as jnp
from jax.experimental import pallas as pl
from jax.experimental.pallas import tpu as pltpu


def _round_up(x, m):
    return (x + m - 1) // m * m


# ------------------------- Pallas kernels -------------------------

def _matmul_bias_relu_kernel(p_ref, w_ref, b_ref, o_ref):
    # Fused conv-as-matmul (bf16 x bf16 -> f32 acc) + bias (folded BN) + ReLU.
    acc = jnp.dot(p_ref[...], w_ref[...], preferred_element_type=jnp.float32)
    o_ref[...] = jnp.maximum(acc + b_ref[...], 0.0)


def _make_window_reduce_kernel(window, mode):
    """(tm, window, C) -> (tm, C) max/mean with an unrolled VPU chain."""
    inv = 1.0 / float(window)

    def kernel(x_ref, o_ref):
        x = x_ref[...]
        acc = x[:, 0, :]
        for t in range(1, window):
            if mode == "max":
                acc = jnp.maximum(acc, x[:, t, :])
            else:
                acc = acc + x[:, t, :]
        o_ref[...] = acc * inv if mode == "mean" else acc

    return kernel


# ------------------------- glue: patch extraction -------------------------

def _extract_patches(x, kh, kw, stride, pad, pad_value=0.0):
    """x: (N, H, W, C) -> (N, Ho, Wo, kh*kw, C) patches (pure slicing glue)."""
    if pad > 0:
        x = jnp.pad(x, ((0, 0), (pad, pad), (pad, pad), (0, 0)),
                    constant_values=pad_value)
    n, h, w, c = x.shape
    ho = (h - kh) // stride + 1
    wo = (w - kw) // stride + 1
    cols = [x[:, i:i + stride * ho:stride, j:j + stride * wo:stride, :]
            for i in range(kh) for j in range(kw)]
    patches = jnp.stack(cols, axis=3)  # (n, ho, wo, kh*kw, c)
    return patches, ho, wo


# ------------------------- fused conv + BN + ReLU -------------------------

def conv_bn_relu(x, w, scale, bias, stride=1, pad=0):
    """x: (N,H,W,Cin) f32; w: (kh,kw,Cin,Cout); scale/bias: folded BN (Cout,)."""
    kh, kw, cin, cout = w.shape
    patches, ho, wo = _extract_patches(x, kh, kw, stride, pad)
    n = x.shape[0]
    m = n * ho * wo
    k = kh * kw * cin

    kp = _round_up(k, 16)                 # sublane pad only; NOT rounded to 128
    cp = _round_up(cout, 128)             # lane-dense output
    tm = min(128, _round_up(m, 8))
    mp = _round_up(m, tm)

    # bf16 MXU operands, BN scale folded into the weight columns.
    p_mat = jnp.pad(patches.reshape(m, k),
                    ((0, mp - m), (0, kp - k))).astype(jnp.bfloat16)
    w_mat = jnp.pad(w.reshape(k, cout) * scale[None, :],
                    ((0, kp - k), (0, cp - cout))).astype(jnp.bfloat16)
    b_row = jnp.pad(bias[None, :].astype(jnp.float32), ((0, 0), (0, cp - cout)))

    out = pl.pallas_call(
        _matmul_bias_relu_kernel,
        out_shape=jax.ShapeDtypeStruct((mp, cp), jnp.float32),
        grid=(mp // tm,),
        in_specs=[
            pl.BlockSpec((tm, kp), lambda i: (i, 0)),
            pl.BlockSpec((kp, cp), lambda i: (0, 0)),
            pl.BlockSpec((1, cp), lambda i: (0, 0)),
        ],
        out_specs=pl.BlockSpec((tm, cp), lambda i: (i, 0)),
        compiler_params=pltpu.CompilerParams(dimension_semantics=("parallel",)),
    )(p_mat, w_mat, b_row)

    return out[:m, :cout].reshape(n, ho, wo, cout)


# ------------------------- pooling -------------------------

def _window_reduce(x3, mode):
    """x3: (M, window, C) f32 -> (M, C) via a Pallas unrolled window reduce."""
    m, window, c = x3.shape
    cp = _round_up(c, 128)
    tm = min(128, _round_up(m, 8))
    mp = _round_up(m, tm)
    xp = jnp.pad(x3, ((0, mp - m), (0, 0), (0, cp - c)))

    out = pl.pallas_call(
        _make_window_reduce_kernel(window, mode),
        out_shape=jax.ShapeDtypeStruct((mp, cp), jnp.float32),
        grid=(mp // tm,),
        in_specs=[pl.BlockSpec((tm, window, cp), lambda i: (i, 0, 0))],
        out_specs=pl.BlockSpec((tm, cp), lambda i: (i, 0)),
        compiler_params=pltpu.CompilerParams(dimension_semantics=("parallel",)),
    )(xp)
    return out[:m, :c]


def max_pool2d(x, kh, kw, stride, pad):
    """MaxPool2d (NHWC).  Spatial padding (if any) uses -inf, not 0."""
    patches, ho, wo = _extract_patches(
        x, kh, kw, stride, pad, pad_value=(-jnp.inf if pad > 0 else 0.0))
    n, c = x.shape[0], x.shape[3]
    m = n * ho * wo
    out = _window_reduce(patches.reshape(m, kh * kw, c), "max")
    return out.reshape(n, ho, wo, c)


def global_avg_pool(x):
    """AdaptiveAvgPool2d((1,1)) + flatten(1): (N,H,W,C) -> (N,C)."""
    n, h, w, c = x.shape
    return _window_reduce(x.reshape(n, h * w, c), "mean")


# ------------------------- merged mixed-block entry -------------------------

def _center_only_3x3(w1x1):
    """(1,1,Cin,Co) 1x1 weight -> (3,3,Cin,Co) with the weight at the center tap."""
    z = jnp.zeros_like(w1x1)
    row = jnp.concatenate([z, w1x1, z], axis=1)        # (1,3,Cin,Co)
    zrow = jnp.zeros_like(row)
    return jnp.concatenate([zrow, row, zrow], axis=0)  # (3,3,Cin,Co)


def mixed_entry(params, x):
    """The four branch-entry convs of the mixed block as ONE Pallas launch.

    b1/b2/b3 1x1 convs == 3x3 pad=1 convs with center-only weights;
    b4 = AvgPool2d(3,1,1,count_include_pad=True) + 1x1 conv == 3x3 pad=1 conv
    with the 1x1 weight /9 broadcast over the window (both linear before
    BN/ReLU), so all four share one im2col of x and one matmul with
    concatenated output columns.
    """
    w1, s1, b1 = params["mixed_b1_1x1"]
    w2, s2, b2 = params["mixed_b2_1x1"]
    w3, s3, b3 = params["mixed_b3_1x1"]
    w4, s4, b4 = params["mixed_b4_1x1"]
    cin = x.shape[-1]
    c1, c2, c3, c4 = (w1.shape[-1], w2.shape[-1], w3.shape[-1], w4.shape[-1])

    w_eff = jnp.concatenate(
        [_center_only_3x3(w1), _center_only_3x3(w2), _center_only_3x3(w3),
         jnp.broadcast_to(w4 / 9.0, (3, 3, cin, c4))], axis=-1)
    scale = jnp.concatenate([s1, s2, s3, s4])
    bias = jnp.concatenate([b1, b2, b3, b4])

    y = conv_bn_relu(x, w_eff, scale, bias, stride=1, pad=1)
    o1 = y[..., :c1]
    o2 = y[..., c1:c1 + c2]
    o3 = y[..., c1 + c2:c1 + c2 + c3]
    o4 = y[..., c1 + c2 + c3:c1 + c2 + c3 + c4]
    return o1, o2, o3, o4


def merged_pair_conv3x3(xa, pa, xb, pb):
    """Two independent 3x3 pad=1 convs on same-spatial inputs as ONE launch.

    Channel-concatenate the inputs and use a block-diagonal weight; with Cout
    lane-padded to 128 either way this is the same padded MXU work but saves a
    pallas_call + im2col round trip.
    """
    wa, sa, ba = pa
    wb, sb, bb = pb
    cai, cao = wa.shape[2], wa.shape[3]
    cbi, cbo = wb.shape[2], wb.shape[3]

    x = jnp.concatenate([xa, xb], axis=-1)
    w_top = jnp.concatenate([wa, jnp.zeros((3, 3, cai, cbo), wa.dtype)], axis=-1)
    w_bot = jnp.concatenate([jnp.zeros((3, 3, cbi, cao), wb.dtype), wb], axis=-1)
    w = jnp.concatenate([w_top, w_bot], axis=2)        # block-diag over Cin
    scale = jnp.concatenate([sa, sb])
    bias = jnp.concatenate([ba, bb])

    y = conv_bn_relu(x, w, scale, bias, stride=1, pad=1)
    return y[..., :cao], y[..., cao:cao + cbo]


# ------------------------- model -------------------------

_LAYER_CFG = [
    # name,            kh, kw, cin, cout
    ("Conv2d_1a_3x3", 3, 3, 3, 8),
    ("Conv2d_2a_3x3", 3, 3, 8, 8),
    ("Conv2d_2b_3x3", 3, 3, 8, 16),
    ("Conv2d_3b_1x1", 1, 1, 16, 16),
    ("Conv2d_4a_3x3", 3, 3, 16, 32),
    ("mixed_b1_1x1", 1, 1, 32, 16),
    ("mixed_b2_1x1", 1, 1, 32, 12),
    ("mixed_b2_3x3", 3, 3, 12, 16),
    ("mixed_b3_1x1", 1, 1, 32, 16),
    ("mixed_b3_3x3a", 3, 3, 16, 16),
    ("mixed_b3_3x3b", 3, 3, 16, 24),
    ("mixed_b4_1x1", 1, 1, 32, 8),
]


def init_params(key):
    """Deterministic synthetic weights; BN (eps=1e-3) folded into scale/bias."""
    params = {}
    for idx, (name, kh, kw, cin, cout) in enumerate(_LAYER_CFG):
        k = jax.random.fold_in(key, idx)
        k_w, k_g, k_b = jax.random.split(k, 3)
        w = jax.random.normal(k_w, (kh, kw, cin, cout), jnp.float32) / jnp.sqrt(
            float(kh * kw * cin))
        gamma = 1.0 + 0.1 * jax.random.normal(k_g, (cout,), jnp.float32)
        beta = 0.1 * jax.random.normal(k_b, (cout,), jnp.float32)
        running_mean = jnp.zeros((cout,), jnp.float32)
        running_var = jnp.ones((cout,), jnp.float32)
        scale = gamma / jnp.sqrt(running_var + 1e-3)
        bias = beta - running_mean * scale
        params[name] = (w, scale, bias)
    return params


def features(params, x):
    """Inception-style feature stack on NHWC input."""
    p = params
    x = conv_bn_relu(x, *p["Conv2d_1a_3x3"], stride=2, pad=0)   # 16 -> 7
    x = conv_bn_relu(x, *p["Conv2d_2a_3x3"], stride=1, pad=0)   # 7 -> 5
    x = conv_bn_relu(x, *p["Conv2d_2b_3x3"], stride=1, pad=1)   # 5 -> 5
    x = max_pool2d(x, 3, 3, 2, 0)                               # 5 -> 2
    x = conv_bn_relu(x, *p["Conv2d_3b_1x1"], stride=1, pad=0)   # 2 -> 2
    x = conv_bn_relu(x, *p["Conv2d_4a_3x3"], stride=1, pad=1)   # 2 -> 2

    # InceptionA-style mixed block: all four branch entries in one launch.
    b1, b2, b3, b4 = mixed_entry(p, x)
    # The two parallel 3x3 convs (b2 3x3, b3 3x3a) share one launch.
    b2, b3 = merged_pair_conv3x3(b2, p["mixed_b2_3x3"], b3, p["mixed_b3_3x3a"])
    b3 = conv_bn_relu(b3, *p["mixed_b3_3x3b"], stride=1, pad=1)
    return jnp.concatenate([b1, b2, b3, b4], axis=-1)           # (N, 2, 2, 64)


def inception_feature_extractor(params, x_nchw):
    """forward(x): features -> adaptive_avg_pool2d((1,1)) -> flatten(1)."""
    x = jnp.transpose(x_nchw, (0, 2, 3, 1)).astype(jnp.float32)  # NCHW -> NHWC
    x = features(params, x)
    return global_avg_pool(x)                                    # (N, 64)


if __name__ == "__main__":
    key = jax.random.PRNGKey(0)
    pkey, xkey = jax.random.split(key)
    params = init_params(pkey)

    # Input follows PyTorch NCHW convention: (batch=2, channels=3, 16, 16)
    x = jax.random.normal(xkey, (2, 3, 16, 16), jnp.float32)

    fwd = jax.jit(inception_feature_extractor)
    feats = fwd(params, x)
    feats = jax.block_until_ready(feats)

    assert feats.shape == (2, 64), feats.shape
    assert bool(jnp.all(jnp.isfinite(feats)))
    print("KERNEL_OK")
</pallas_src>

<mosaic_0001>
module attributes {stable_mosaic.version = 11 : i64} {
  func.func @_matmul_bias_relu_kernel(%arg0: i32, %arg1: memref<104x32xbf16, #tpu.memory_space<vmem>>, %arg2: memref<32x128xbf16, #tpu.memory_space<vmem>>, %arg3: memref<1x128xf32, #tpu.memory_space<vmem>>, %arg4: memref<104x128xf32, #tpu.memory_space<vmem>>) attributes {dimension_semantics = [#tpu.dimension_semantics<parallel>], iteration_bounds = array<i64: 1>, scalar_prefetch = 0 : i64, scratch_operands = 0 : i64, tpu.core_type = #tpu.core_type<tc>, window_params = [{transform_indices = @transform_0, window_bounds = array<i64: 104, 32>}, {pipeline_mode = #tpu.pipeline_mode<synchronous>, transform_indices = @transform_1, window_bounds = array<i64: 32, 128>}, {pipeline_mode = #tpu.pipeline_mode<synchronous>, transform_indices = @transform_2, window_bounds = array<i64: 1, 128>}, {transform_indices = @transform_3, window_bounds = array<i64: 104, 128>}]} {
    %c0 = arith.constant 0 : index
    %c0_0 = arith.constant 0 : index
    %0 = vector.load %arg1[%c0, %c0_0] : memref<104x32xbf16, #tpu.memory_space<vmem>>, vector<104x32xbf16>
    %c0_1 = arith.constant 0 : index
    %c0_2 = arith.constant 0 : index
    %1 = vector.load %arg2[%c0_1, %c0_2] : memref<32x128xbf16, #tpu.memory_space<vmem>>, vector<32x128xbf16>
    %cst = arith.constant dense<0.000000e+00> : vector<104x128xf32>
    %2 = tpu.matmul %0, %1, %cst {dimension_numbers = #tpu.dot_dimension_numbers<[1], [0], [0], [1], [0, 0, 1, 1], [], []>} : vector<104x32xbf16>, vector<32x128xbf16>, vector<104x128xf32> -> vector<104x128xf32>
    %c0_3 = arith.constant 0 : index
    %c0_4 = arith.constant 0 : index
    %3 = vector.load %arg3[%c0_3, %c0_4] : memref<1x128xf32, #tpu.memory_space<vmem>>, vector<1x128xf32>
    %4 = vector.broadcast %3 : vector<1x128xf32> to vector<104x128xf32>
    %5 = arith.addf %2, %4 : vector<104x128xf32>
    %cst_5 = arith.constant 0.000000e+00 : f32
    %6 = vector.broadcast %cst_5 : f32 to vector<104x128xf32>
    %7 = arith.maximumf %5, %6 : vector<104x128xf32>
    %c0_6 = arith.constant 0 : index
    %c0_7 = arith.constant 0 : index
    %8 = vector.load %arg4[%c0_6, %c0_7] : memref<104x128xf32, #tpu.memory_space<vmem>>, vector<104x128xf32>
    tpu.vector_store %arg4[%c0_6, %c0_7], %7 {strides = array<i32>} : memref<104x128xf32, #tpu.memory_space<vmem>>, vector<104x128xf32>,
    return
  }
  func.func @transform_0(%arg0: i32) -> (i32, i32) {
    %c0_i32 = arith.constant 0 : i32
    %c0_i32_0 = arith.constant 0 : i32
    return %arg0, %c0_i32 : i32, i32
  }
  func.func @transform_1(%arg0: i32) -> (i32, i32) {
    %c0_i32 = arith.constant 0 : i32
    %c0_i32_0 = arith.constant 0 : i32
    %c0_i32_1 = arith.constant 0 : i32
    return %c0_i32, %c0_i32_0 : i32, i32
  }
  func.func @transform_2(%arg0: i32) -> (i32, i32) {
    %c0_i32 = arith.constant 0 : i32
    %c0_i32_0 = arith.constant 0 : i32
    %c0_i32_1 = arith.constant 0 : i32
    return %c0_i32, %c0_i32_0 : i32, i32
  }
  func.func @transform_3(%arg0: i32) -> (i32, i32) {
    %c0_i32 = arith.constant 0 : i32
    %c0_i32_0 = arith.constant 0 : i32
    return %arg0, %c0_i32 : i32, i32
  }
}

module attributes {stable_mosaic.version = 11 : i64} {
  func.func @_matmul_bias_relu_kernel(%arg0: i32, %arg1: memref<56x80xbf16, #tpu.memory_space<vmem>>, %arg2: memref<80x128xbf16, #tpu.memory_space<vmem>>, %arg3: memref<1x128xf32, #tpu.memory_space<vmem>>, %arg4: memref<56x128xf32, #tpu.memory_space<vmem>>) attributes {dimension_semantics = [#tpu.dimension_semantics<parallel>], iteration_bounds = array<i64: 1>, scalar_prefetch = 0 : i64, scratch_operands = 0 : i64, tpu.core_type = #tpu.core_type<tc>, window_params = [{transform_indices = @transform_0, window_bounds = array<i64: 56, 80>}, {pipeline_mode = #tpu.pipeline_mode<synchronous>, transform_indices = @transform_1, window_bounds = array<i64: 80, 128>}, {pipeline_mode = #tpu.pipeline_mode<synchronous>, transform_indices = @transform_2, window_bounds = array<i64: 1, 128>}, {transform_indices = @transform_3, window_bounds = array<i64: 56, 128>}]} {
    %c0 = arith.constant 0 : index
    %c0_0 = arith.constant 0 : index
    %0 = vector.load %arg1[%c0, %c0_0] : memref<56x80xbf16, #tpu.memory_space<vmem>>, vector<56x80xbf16>
    %c0_1 = arith.constant 0 : index
    %c0_2 = arith.constant 0 : index
    %1 = vector.load %arg2[%c0_1, %c0_2] : memref<80x128xbf16, #tpu.memory_space<vmem>>, vector<80x128xbf16>
    %cst = arith.constant dense<0.000000e+00> : vector<56x128xf32>
    %2 = tpu.matmul %0, %1, %cst {dimension_numbers = #tpu.dot_dimension_numbers<[1], [0], [0], [1], [0, 0, 1, 1], [], []>} : vector<56x80xbf16>, vector<80x128xbf16>, vector<56x128xf32> -> vector<56x128xf32>
    %c0_3 = arith.constant 0 : index
    %c0_4 = arith.constant 0 : index
    %3 = vector.load %arg3[%c0_3, %c0_4] : memref<1x128xf32, #tpu.memory_space<vmem>>, vector<1x128xf32>
    %4 = vector.broadcast %3 : vector<1x128xf32> to vector<56x128xf32>
    %5 = arith.addf %2, %4 : vector<56x128xf32>
    %cst_5 = arith.constant 0.000000e+00 : f32
    %6 = vector.broadcast %cst_5 : f32 to vector<56x128xf32>
    %7 = arith.maximumf %5, %6 : vector<56x128xf32>
    %c0_6 = arith.constant 0 : index
    %c0_7 = arith.constant 0 : index
    %8 = vector.load %arg4[%c0_6, %c0_7] : memref<56x128xf32, #tpu.memory_space<vmem>>, vector<56x128xf32>
    tpu.vector_store %arg4[%c0_6, %c0_7], %7 {strides = array<i32>} : memref<56x128xf32, #tpu.memory_space<vmem>>, vector<56x128xf32>,
    return
  }
  func.func @transform_0(%arg0: i32) -> (i32, i32) {
    %c0_i32 = arith.constant 0 : i32
    %c0_i32_0 = arith.constant 0 : i32
    return %arg0, %c0_i32 : i32, i32
  }
  func.func @transform_1(%arg0: i32) -> (i32, i32) {
    %c0_i32 = arith.constant 0 : i32
    %c0_i32_0 = arith.constant 0 : i32
    %c0_i32_1 = arith.constant 0 : i32
    return %c0_i32, %c0_i32_0 : i32, i32
  }
  func.func @transform_2(%arg0: i32) -> (i32, i32) {
    %c0_i32 = arith.constant 0 : i32
    %c0_i32_0 = arith.constant 0 : i32
    %c0_i32_1 = arith.constant 0 : i32
    return %c0_i32, %c0_i32_0 : i32, i32
  }
  func.func @transform_3(%arg0: i32) -> (i32, i32) {
    %c0_i32 = arith.constant 0 : i32
    %c0_i32_0 = arith.constant 0 : i32
    return %arg0, %c0_i32 : i32, i32
  }
}

module attributes {stable_mosaic.version = 11 : i64} {
  func.func @_matmul_bias_relu_kernel(%arg0: i32, %arg1: memref<8x16xbf16, #tpu.memory_space<vmem>>, %arg2: memref<16x128xbf16, #tpu.memory_space<vmem>>, %arg3: memref<1x128xf32, #tpu.memory_space<vmem>>, %arg4: memref<8x128xf32, #tpu.memory_space<vmem>>) attributes {dimension_semantics = [#tpu.dimension_semantics<parallel>], iteration_bounds = array<i64: 1>, scalar_prefetch = 0 : i64, scratch_operands = 0 : i64, tpu.core_type = #tpu.core_type<tc>, window_params = [{transform_indices = @transform_0, window_bounds = array<i64: 8, 16>}, {pipeline_mode = #tpu.pipeline_mode<synchronous>, transform_indices = @transform_1, window_bounds = array<i64: 16, 128>}, {pipeline_mode = #tpu.pipeline_mode<synchronous>, transform_indices = @transform_2, window_bounds = array<i64: 1, 128>}, {transform_indices = @transform_3, window_bounds = array<i64: 8, 128>}]} {
    %c0 = arith.constant 0 : index
    %c0_0 = arith.constant 0 : index
    %0 = vector.load %arg1[%c0, %c0_0] : memref<8x16xbf16, #tpu.memory_space<vmem>>, vector<8x16xbf16>
    %c0_1 = arith.constant 0 : index
    %c0_2 = arith.constant 0 : index
    %1 = vector.load %arg2[%c0_1, %c0_2] : memref<16x128xbf16, #tpu.memory_space<vmem>>, vector<16x128xbf16>
    %cst = arith.constant dense<0.000000e+00> : vector<8x128xf32>
    %2 = tpu.matmul %0, %1, %cst {dimension_numbers = #tpu.dot_dimension_numbers<[1], [0], [0], [1], [0, 0, 1, 1], [], []>} : vector<8x16xbf16>, vector<16x128xbf16>, vector<8x128xf32> -> vector<8x128xf32>
    %c0_3 = arith.constant 0 : index
    %c0_4 = arith.constant 0 : index
    %3 = vector.load %arg3[%c0_3, %c0_4] : memref<1x128xf32, #tpu.memory_space<vmem>>, vector<1x128xf32>
    %4 = vector.broadcast %3 : vector<1x128xf32> to vector<8x128xf32>
    %5 = arith.addf %2, %4 : vector<8x128xf32>
    %cst_5 = arith.constant 0.000000e+00 : f32
    %6 = vector.broadcast %cst_5 : f32 to vector<8x128xf32>
    %7 = arith.maximumf %5, %6 : vector<8x128xf32>
    %c0_6 = arith.constant 0 : index
    %c0_7 = arith.constant 0 : index
    %8 = vector.load %arg4[%c0_6, %c0_7] : memref<8x128xf32, #tpu.memory_space<vmem>>, vector<8x128xf32>
    tpu.vector_store %arg4[%c0_6, %c0_7], %7 {strides = array<i32>} : memref<8x128xf32, #tpu.memory_space<vmem>>, vector<8x128xf32>,
    return
  }
  func.func @transform_0(%arg0: i32) -> (i32, i32) {
    %c0_i32 = arith.constant 0 : i32
    %c0_i32_0 = arith.constant 0 : i32
    return %arg0, %c0_i32 : i32, i32
  }
  func.func @transform_1(%arg0: i32) -> (i32, i32) {
    %c0_i32 = arith.constant 0 : i32
    %c0_i32_0 = arith.constant 0 : i32
    %c0_i32_1 = arith.constant 0 : i32
    return %c0_i32, %c0_i32_0 : i32, i32
  }
  func.func @transform_2(%arg0: i32) -> (i32, i32) {
    %c0_i32 = arith.constant 0 : i32
    %c0_i32_0 = arith.constant 0 : i32
    %c0_i32_1 = arith.constant 0 : i32
    return %c0_i32, %c0_i32_0 : i32, i32
  }
  func.func @transform_3(%arg0: i32) -> (i32, i32) {
    %c0_i32 = arith.constant 0 : i32
    %c0_i32_0 = arith.constant 0 : i32
    return %arg0, %c0_i32 : i32, i32
  }
}

module attributes {stable_mosaic.version = 11 : i64} {
  func.func @kernel(%arg0: i32, %arg1: memref<8x9x128xf32, #tpu.memory_space<vmem>>, %arg2: memref<8x128xf32, #tpu.memory_space<vmem>>) attributes {dimension_semantics = [#tpu.dimension_semantics<parallel>], iteration_bounds = array<i64: 1>, scalar_prefetch = 0 : i64, scratch_operands = 0 : i64, tpu.core_type = #tpu.core_type<tc>, window_params = [{transform_indices = @transform_0, window_bounds = array<i64: 8, 9, 128>}, {transform_indices = @transform_1, window_bounds = array<i64: 8, 128>}]} {
    %c0 = arith.constant 0 : index
    %c0_0 = arith.constant 0 : index
    %c0_1 = arith.constant 0 : index
    %0 = vector.load %arg1[%c0, %c0_0, %c0_1] : memref<8x9x128xf32, #tpu.memory_space<vmem>>, vector<8x9x128xf32>
    %1 = vector.extract_strided_slice %0 {offsets = [0, 0, 0], sizes = [8, 1, 128], strides = [1, 1, 1]} : vector<8x9x128xf32> to vector<8x1x128xf32>
    %2 = vector.shape_cast %1 : vector<8x1x128xf32> to vector<8x128xf32>
    %3 = vector.extract_strided_slice %0 {offsets = [0, 1, 0], sizes = [8, 1, 128], strides = [1, 1, 1]} : vector<8x9x128xf32> to vector<8x1x128xf32>
    %4 = vector.shape_cast %3 : vector<8x1x128xf32> to vector<8x128xf32>
    %5 = arith.maximumf %2, %4 : vector<8x128xf32>
    %6 = vector.extract_strided_slice %0 {offsets = [0, 2, 0], sizes = [8, 1, 128], strides = [1, 1, 1]} : vector<8x9x128xf32> to vector<8x1x128xf32>
    %7 = vector.shape_cast %6 : vector<8x1x128xf32> to vector<8x128xf32>
    %8 = arith.maximumf %5, %7 : vector<8x128xf32>
    %9 = vector.extract_strided_slice %0 {offsets = [0, 3, 0], sizes = [8, 1, 128], strides = [1, 1, 1]} : vector<8x9x128xf32> to vector<8x1x128xf32>
    %10 = vector.shape_cast %9 : vector<8x1x128xf32> to vector<8x128xf32>
    %11 = arith.maximumf %8, %10 : vector<8x128xf32>
    %12 = vector.extract_strided_slice %0 {offsets = [0, 4, 0], sizes = [8, 1, 128], strides = [1, 1, 1]} : vector<8x9x128xf32> to vector<8x1x128xf32>
    %13 = vector.shape_cast %12 : vector<8x1x128xf32> to vector<8x128xf32>
    %14 = arith.maximumf %11, %13 : vector<8x128xf32>
    %15 = vector.extract_strided_slice %0 {offsets = [0, 5, 0], sizes = [8, 1, 128], strides = [1, 1, 1]} : vector<8x9x128xf32> to vector<8x1x128xf32>
    %16 = vector.shape_cast %15 : vector<8x1x128xf32> to vector<8x128xf32>
    %17 = arith.maximumf %14, %16 : vector<8x128xf32>
    %18 = vector.extract_strided_slice %0 {offsets = [0, 6, 0], sizes = [8, 1, 128], strides = [1, 1, 1]} : vector<8x9x128xf32> to vector<8x1x128xf32>
    %19 = vector.shape_cast %18 : vector<8x1x128xf32> to vector<8x128xf32>
    %20 = arith.maximumf %17, %19 : vector<8x128xf32>
    %21 = vector.extract_strided_slice %0 {offsets = [0, 7, 0], sizes = [8, 1, 128], strides = [1, 1, 1]} : vector<8x9x128xf32> to vector<8x1x128xf32>
    %22 = vector.shape_cast %21 : vector<8x1x128xf32> to vector<8x128xf32>
    %23 = arith.maximumf %20, %22 : vector<8x128xf32>
    %24 = vector.extract_strided_slice %0 {offsets = [0, 8, 0], sizes = [8, 1, 128], strides = [1, 1, 1]} : vector<8x9x128xf32> to vector<8x1x128xf32>
    %25 = vector.shape_cast %24 : vector<8x1x128xf32> to vector<8x128xf32>
    %26 = arith.maximumf %23, %25 : vector<8x128xf32>
    %c0_2 = arith.constant 0 : index
    %c0_3 = arith.constant 0 : index
    %27 = vector.load %arg2[%c0_2, %c0_3] : memref<8x128xf32, #tpu.memory_space<vmem>>, vector<8x128xf32>
    tpu.vector_store %arg2[%c0_2, %c0_3], %26 {strides = array<i32>} : memref<8x128xf32, #tpu.memory_space<vmem>>, vector<8x128xf32>,
    return
  }
  func.func @transform_0(%arg0: i32) -> (i32, i32, i32) {
    %c0_i32 = arith.constant 0 : i32
    %c0_i32_0 = arith.constant 0 : i32
    %c0_i32_1 = arith.constant 0 : i32
    return %arg0, %c0_i32, %c0_i32_0 : i32, i32, i32
  }
  func.func @transform_1(%arg0: i32) -> (i32, i32) {
    %c0_i32 = arith.constant 0 : i32
    %c0_i32_0 = arith.constant 0 : i32
    return %arg0, %c0_i32 : i32, i32
  }
}

module attributes {stable_mosaic.version = 11 : i64} {
  func.func @_matmul_bias_relu_kernel(%arg0: i32, %arg1: memref<8x144xbf16, #tpu.memory_space<vmem>>, %arg2: memref<144x128xbf16, #tpu.memory_space<vmem>>, %arg3: memref<1x128xf32, #tpu.memory_space<vmem>>, %arg4: memref<8x128xf32, #tpu.memory_space<vmem>>) attributes {dimension_semantics = [#tpu.dimension_semantics<parallel>], iteration_bounds = array<i64: 1>, scalar_prefetch = 0 : i64, scratch_operands = 0 : i64, tpu.core_type = #tpu.core_type<tc>, window_params = [{transform_indices = @transform_0, window_bounds = array<i64: 8, 144>}, {pipeline_mode = #tpu.pipeline_mode<synchronous>, transform_indices = @transform_1, window_bounds = array<i64: 144, 128>}, {pipeline_mode = #tpu.pipeline_mode<synchronous>, transform_indices = @transform_2, window_bounds = array<i64: 1, 128>}, {transform_indices = @transform_3, window_bounds = array<i64: 8, 128>}]} {
    %c0 = arith.constant 0 : index
    %c0_0 = arith.constant 0 : index
    %0 = vector.load %arg1[%c0, %c0_0] : memref<8x144xbf16, #tpu.memory_space<vmem>>, vector<8x144xbf16>
    %c0_1 = arith.constant 0 : index
    %c0_2 = arith.constant 0 : index
    %1 = vector.load %arg2[%c0_1, %c0_2] : memref<144x128xbf16, #tpu.memory_space<vmem>>, vector<144x128xbf16>
    %cst = arith.constant dense<0.000000e+00> : vector<8x128xf32>
    %2 = tpu.matmul %0, %1, %cst {dimension_numbers = #tpu.dot_dimension_numbers<[1], [0], [0], [1], [0, 0, 1, 1], [], []>} : vector<8x144xbf16>, vector<144x128xbf16>, vector<8x128xf32> -> vector<8x128xf32>
    %c0_3 = arith.constant 0 : index
    %c0_4 = arith.constant 0 : index
    %3 = vector.load %arg3[%c0_3, %c0_4] : memref<1x128xf32, #tpu.memory_space<vmem>>, vector<1x128xf32>
    %4 = vector.broadcast %3 : vector<1x128xf32> to vector<8x128xf32>
    %5 = arith.addf %2, %4 : vector<8x128xf32>
    %cst_5 = arith.constant 0.000000e+00 : f32
    %6 = vector.broadcast %cst_5 : f32 to vector<8x128xf32>
    %7 = arith.maximumf %5, %6 : vector<8x128xf32>
    %c0_6 = arith.constant 0 : index
    %c0_7 = arith.constant 0 : index
    %8 = vector.load %arg4[%c0_6, %c0_7] : memref<8x128xf32, #tpu.memory_space<vmem>>, vector<8x128xf32>
    tpu.vector_store %arg4[%c0_6, %c0_7], %7 {strides = array<i32>} : memref<8x128xf32, #tpu.memory_space<vmem>>, vector<8x128xf32>,
    return
  }
  func.func @transform_0(%arg0: i32) -> (i32, i32) {
    %c0_i32 = arith.constant 0 : i32
    %c0_i32_0 = arith.constant 0 : i32
    return %arg0, %c0_i32 : i32, i32
  }
  func.func @transform_1(%arg0: i32) -> (i32, i32) {
    %c0_i32 = arith.constant 0 : i32
    %c0_i32_0 = arith.constant 0 : i32
    %c0_i32_1 = arith.constant 0 : i32
    return %c0_i32, %c0_i32_0 : i32, i32
  }
  func.func @transform_2(%arg0: i32) -> (i32, i32) {
    %c0_i32 = arith.constant 0 : i32
    %c0_i32_0 = arith.constant 0 : i32
    %c0_i32_1 = arith.constant 0 : i32
    return %c0_i32, %c0_i32_0 : i32, i32
  }
  func.func @transform_3(%arg0: i32) -> (i32, i32) {
    %c0_i32 = arith.constant 0 : i32
    %c0_i32_0 = arith.constant 0 : i32
    return %arg0, %c0_i32 : i32, i32
  }
}

module attributes {stable_mosaic.version = 11 : i64} {
  func.func @_matmul_bias_relu_kernel(%arg0: i32, %arg1: memref<8x288xbf16, #tpu.memory_space<vmem>>, %arg2: memref<288x128xbf16, #tpu.memory_space<vmem>>, %arg3: memref<1x128xf32, #tpu.memory_space<vmem>>, %arg4: memref<8x128xf32, #tpu.memory_space<vmem>>) attributes {dimension_semantics = [#tpu.dimension_semantics<parallel>], iteration_bounds = array<i64: 1>, scalar_prefetch = 0 : i64, scratch_operands = 0 : i64, tpu.core_type = #tpu.core_type<tc>, window_params = [{transform_indices = @transform_0, window_bounds = array<i64: 8, 288>}, {pipeline_mode = #tpu.pipeline_mode<synchronous>, transform_indices = @transform_1, window_bounds = array<i64: 288, 128>}, {pipeline_mode = #tpu.pipeline_mode<synchronous>, transform_indices = @transform_2, window_bounds = array<i64: 1, 128>}, {transform_indices = @transform_3, window_bounds = array<i64: 8, 128>}]} {
    %c0 = arith.constant 0 : index
    %c0_0 = arith.constant 0 : index
    %0 = vector.load %arg1[%c0, %c0_0] : memref<8x288xbf16, #tpu.memory_space<vmem>>, vector<8x288xbf16>
    %c0_1 = arith.constant 0 : index
    %c0_2 = arith.constant 0 : index
    %1 = vector.load %arg2[%c0_1, %c0_2] : memref<288x128xbf16, #tpu.memory_space<vmem>>, vector<288x128xbf16>
    %cst = arith.constant dense<0.000000e+00> : vector<8x128xf32>
    %2 = tpu.matmul %0, %1, %cst {dimension_numbers = #tpu.dot_dimension_numbers<[1], [0], [0], [1], [0, 0, 1, 1], [], []>} : vector<8x288xbf16>, vector<288x128xbf16>, vector<8x128xf32> -> vector<8x128xf32>
    %c0_3 = arith.constant 0 : index
    %c0_4 = arith.constant 0 : index
    %3 = vector.load %arg3[%c0_3, %c0_4] : memref<1x128xf32, #tpu.memory_space<vmem>>, vector<1x128xf32>
    %4 = vector.broadcast %3 : vector<1x128xf32> to vector<8x128xf32>
    %5 = arith.addf %2, %4 : vector<8x128xf32>
    %cst_5 = arith.constant 0.000000e+00 : f32
    %6 = vector.broadcast %cst_5 : f32 to vector<8x128xf32>
    %7 = arith.maximumf %5, %6 : vector<8x128xf32>
    %c0_6 = arith.constant 0 : index
    %c0_7 = arith.constant 0 : index
    %8 = vector.load %arg4[%c0_6, %c0_7] : memref<8x128xf32, #tpu.memory_space<vmem>>, vector<8x128xf32>
    tpu.vector_store %arg4[%c0_6, %c0_7], %7 {strides = array<i32>} : memref<8x128xf32, #tpu.memory_space<vmem>>, vector<8x128xf32>,
    return
  }
  func.func @transform_0(%arg0: i32) -> (i32, i32) {
    %c0_i32 = arith.constant 0 : i32
    %c0_i32_0 = arith.constant 0 : i32
    return %arg0, %c0_i32 : i32, i32
  }
  func.func @transform_1(%arg0: i32) -> (i32, i32) {
    %c0_i32 = arith.constant 0 : i32
    %c0_i32_0 = arith.constant 0 : i32
    %c0_i32_1 = arith.constant 0 : i32
    return %c0_i32, %c0_i32_0 : i32, i32
  }
  func.func @transform_2(%arg0: i32) -> (i32, i32) {
    %c0_i32 = arith.constant 0 : i32
    %c0_i32_0 = arith.constant 0 : i32
    %c0_i32_1 = arith.constant 0 : i32
    return %c0_i32, %c0_i32_0 : i32, i32
  }
  func.func @transform_3(%arg0: i32) -> (i32, i32) {
    %c0_i32 = arith.constant 0 : i32
    %c0_i32_0 = arith.constant 0 : i32
    return %arg0, %c0_i32 : i32, i32
  }
}

module attributes {stable_mosaic.version = 11 : i64} {
  func.func @_matmul_bias_relu_kernel(%arg0: i32, %arg1: memref<8x256xbf16, #tpu.memory_space<vmem>>, %arg2: memref<256x128xbf16, #tpu.memory_space<vmem>>, %arg3: memref<1x128xf32, #tpu.memory_space<vmem>>, %arg4: memref<8x128xf32, #tpu.memory_space<vmem>>) attributes {dimension_semantics = [#tpu.dimension_semantics<parallel>], iteration_bounds = array<i64: 1>, scalar_prefetch = 0 : i64, scratch_operands = 0 : i64, tpu.core_type = #tpu.core_type<tc>, window_params = [{transform_indices = @transform_0, window_bounds = array<i64: 8, 256>}, {pipeline_mode = #tpu.pipeline_mode<synchronous>, transform_indices = @transform_1, window_bounds = array<i64: 256, 128>}, {pipeline_mode = #tpu.pipeline_mode<synchronous>, transform_indices = @transform_2, window_bounds = array<i64: 1, 128>}, {transform_indices = @transform_3, window_bounds = array<i64: 8, 128>}]} {
    %c0 = arith.constant 0 : index
    %c0_0 = arith.constant 0 : index
    %0 = vector.load %arg1[%c0, %c0_0] : memref<8x256xbf16, #tpu.memory_space<vmem>>, vector<8x256xbf16>
    %c0_1 = arith.constant 0 : index
    %c0_2 = arith.constant 0 : index
    %1 = vector.load %arg2[%c0_1, %c0_2] : memref<256x128xbf16, #tpu.memory_space<vmem>>, vector<256x128xbf16>
    %cst = arith.constant dense<0.000000e+00> : vector<8x128xf32>
    %2 = tpu.matmul %0, %1, %cst {dimension_numbers = #tpu.dot_dimension_numbers<[1], [0], [0], [1], [0, 0, 1, 1], [], []>} : vector<8x256xbf16>, vector<256x128xbf16>, vector<8x128xf32> -> vector<8x128xf32>
    %c0_3 = arith.constant 0 : index
    %c0_4 = arith.constant 0 : index
    %3 = vector.load %arg3[%c0_3, %c0_4] : memref<1x128xf32, #tpu.memory_space<vmem>>, vector<1x128xf32>
    %4 = vector.broadcast %3 : vector<1x128xf32> to vector<8x128xf32>
    %5 = arith.addf %2, %4 : vector<8x128xf32>
    %cst_5 = arith.constant 0.000000e+00 : f32
    %6 = vector.broadcast %cst_5 : f32 to vector<8x128xf32>
    %7 = arith.maximumf %5, %6 : vector<8x128xf32>
    %c0_6 = arith.constant 0 : index
    %c0_7 = arith.constant 0 : index
    %8 = vector.load %arg4[%c0_6, %c0_7] : memref<8x128xf32, #tpu.memory_space<vmem>>, vector<8x128xf32>
    tpu.vector_store %arg4[%c0_6, %c0_7], %7 {strides = array<i32>} : memref<8x128xf32, #tpu.memory_space<vmem>>, vector<8x128xf32>,
    return
  }
  func.func @transform_0(%arg0: i32) -> (i32, i32) {
    %c0_i32 = arith.constant 0 : i32
    %c0_i32_0 = arith.constant 0 : i32
    return %arg0, %c0_i32 : i32, i32
  }
  func.func @transform_1(%arg0: i32) -> (i32, i32) {
    %c0_i32 = arith.constant 0 : i32
    %c0_i32_0 = arith.constant 0 : i32
    %c0_i32_1 = arith.constant 0 : i32
    return %c0_i32, %c0_i32_0 : i32, i32
  }
  func.func @transform_2(%arg0: i32) -> (i32, i32) {
    %c0_i32 = arith.constant 0 : i32
    %c0_i32_0 = arith.constant 0 : i32
    %c0_i32_1 = arith.constant 0 : i32
    return %c0_i32, %c0_i32_0 : i32, i32
  }
  func.func @transform_3(%arg0: i32) -> (i32, i32) {
    %c0_i32 = arith.constant 0 : i32
    %c0_i32_0 = arith.constant 0 : i32
    return %arg0, %c0_i32 : i32, i32
  }
}

module attributes {stable_mosaic.version = 11 : i64} {
  func.func @kernel(%arg0: i32, %arg1: memref<8x4x128xf32, #tpu.memory_space<vmem>>, %arg2: memref<8x128xf32, #tpu.memory_space<vmem>>) attributes {dimension_semantics = [#tpu.dimension_semantics<parallel>], iteration_bounds = array<i64: 1>, scalar_prefetch = 0 : i64, scratch_operands = 0 : i64, tpu.core_type = #tpu.core_type<tc>, window_params = [{transform_indices = @transform_0, window_bounds = array<i64: 8, 4, 128>}, {transform_indices = @transform_1, window_bounds = array<i64: 8, 128>}]} {
    %c0 = arith.constant 0 : index
    %c0_0 = arith.constant 0 : index
    %c0_1 = arith.constant 0 : index
    %0 = vector.load %arg1[%c0, %c0_0, %c0_1] : memref<8x4x128xf32, #tpu.memory_space<vmem>>, vector<8x4x128xf32>
    %1 = vector.extract_strided_slice %0 {offsets = [0, 0, 0], sizes = [8, 1, 128], strides = [1, 1, 1]} : vector<8x4x128xf32> to vector<8x1x128xf32>
    %2 = vector.shape_cast %1 : vector<8x1x128xf32> to vector<8x128xf32>
    %3 = vector.extract_strided_slice %0 {offsets = [0, 1, 0], sizes = [8, 1, 128], strides = [1, 1, 1]} : vector<8x4x128xf32> to vector<8x1x128xf32>
    %4 = vector.shape_cast %3 : vector<8x1x128xf32> to vector<8x128xf32>
    %5 = arith.addf %2, %4 : vector<8x128xf32>
    %6 = vector.extract_strided_slice %0 {offsets = [0, 2, 0], sizes = [8, 1, 128], strides = [1, 1, 1]} : vector<8x4x128xf32> to vector<8x1x128xf32>
    %7 = vector.shape_cast %6 : vector<8x1x128xf32> to vector<8x128xf32>
    %8 = arith.addf %5, %7 : vector<8x128xf32>
    %9 = vector.extract_strided_slice %0 {offsets = [0, 3, 0], sizes = [8, 1, 128], strides = [1, 1, 1]} : vector<8x4x128xf32> to vector<8x1x128xf32>
    %10 = vector.shape_cast %9 : vector<8x1x128xf32> to vector<8x128xf32>
    %11 = arith.addf %8, %10 : vector<8x128xf32>
    %cst = arith.constant 2.500000e-01 : f32
    %12 = vector.broadcast %cst : f32 to vector<8x128xf32>
    %13 = arith.mulf %11, %12 : vector<8x128xf32>
    %c0_2 = arith.constant 0 : index
    %c0_3 = arith.constant 0 : index
    %14 = vector.load %arg2[%c0_2, %c0_3] : memref<8x128xf32, #tpu.memory_space<vmem>>, vector<8x128xf32>
    tpu.vector_store %arg2[%c0_2, %c0_3], %13 {strides = array<i32>} : memref<8x128xf32, #tpu.memory_space<vmem>>, vector<8x128xf32>,
    return
  }
  func.func @transform_0(%arg0: i32) -> (i32, i32, i32) {
    %c0_i32 = arith.constant 0 : i32
    %c0_i32_0 = arith.constant 0 : i32
    %c0_i32_1 = arith.constant 0 : i32
    return %arg0, %c0_i32, %c0_i32_0 : i32, i32, i32
  }
  func.func @transform_1(%arg0: i32) -> (i32, i32) {
    %c0_i32 = arith.constant 0 : i32
    %c0_i32_0 = arith.constant 0 : i32
    return %arg0, %c0_i32 : i32, i32
  }
}

</mosaic_0001>

<llo_original>
// kernel: inception_feature_extractor.10
$region0: #{inception_feature_extractor.10}
  #allocation0 [shape = 'u32[]', space=smem, size = 0x4, offset = 0x4, fixed_abs, tag = 'smem constant byte address 0x4 - core index']
  #allocation1 [shape = 'u32[144,128]{1,0:T(1,128)}', space=vmem, size = 0x12000, scoped, tag = 'internal scratch']
  %s0 = inlined_call_operand.vmem [shape: bf16[104,32], index: 0, kind: input, shape index: {}]
  %s1 = inlined_call_operand.vmem [shape: bf16[32,128], index: 1, kind: input, shape index: {}]
  %s2 = inlined_call_operand.vmem [shape: f32[1,128], index: 2, kind: input, shape index: {}]
  %s3 = inlined_call_operand.vmem [shape: f32[104,128], index: 3, kind: output, shape index: {}]
  %s4 = sld [smem:[#allocation0]]
  $region22: #{inception_feature_extractor.10} parent=0
    _
  %s6 = ssub.s32 1, %s4
  %s7 = scalar_select 0, %s6, %s4
  // Predicated region
  $region2: #{inception_feature_extractor.10} parent=0 // pred_check
    _
  $region3: #{inception_feature_extractor.10} parent=0 // pred_check_branch
    %9 = sbr.rel (0) target = $region5
  $region4: #{inception_feature_extractor.10} parent=0 // pred_region
    _
  $region5: #{inception_feature_extractor.10} parent=0 // pred_fallthru
    _
  // Predicated region
  $region6: #{inception_feature_extractor.10} parent=0 // pred_check
    _
  $region7: #{inception_feature_extractor.10} parent=0 // pred_check_branch
    %11 = sbr.rel (0) target = $region9
  $region8: #{inception_feature_extractor.10} parent=0 // pred_region
    _
  $region9: #{inception_feature_extractor.10} parent=0 // pred_fallthru
    _
  // Predicated region
  $region10: #{inception_feature_extractor.10} parent=0 // pred_check
    _
  $region11: #{inception_feature_extractor.10} parent=0 // pred_check_branch
    %13 = sbr.rel (0) target = $region13
  $region12: #{inception_feature_extractor.10} parent=0 // pred_region
    _
  $region13: #{inception_feature_extractor.10} parent=0 // pred_fallthru
    _
  %v15 = vld [vmem:[%s0] sm:$0xf]
  %v16 = vld [vmem:[%s0 + $0x4] sm:$0xf]
  %v17 = vld [vmem:[%s0 + $0x8] sm:$0xf]
  %v18 = vld [vmem:[%s0 + $0xc] sm:$0xf]
  %v19 = vld [vmem:[%s0 + $0x10] sm:$0xf]
  %v20 = vld [vmem:[%s0 + $0x14] sm:$0xf]
  %v21 = vld [vmem:[%s0 + $0x18] sm:$0xf]
  %v22 = vld [vmem:[%s0 + $0x1c] sm:$0xf]
  %v23 = vld [vmem:[%s0 + $0x20] sm:$0xf]
  %v24 = vld [vmem:[%s0 + $0x24] sm:$0xf]
  %v25 = vld [vmem:[%s0 + $0x28] sm:$0xf]
  %v26 = vld [vmem:[%s0 + $0x2c] sm:$0xf]
  %v27 = vld [vmem:[%s0 + $0x30] sm:$0xf]
  %v28 = vld [vmem:[%s1] sm:$0xf]
  %v29 = vld [vmem:[%s1 + $0x4] sm:$0xf]
  %v30 = vld [vmem:[%s1 + $0x8] sm:$0xf]
  %v31 = vld [vmem:[%s1 + $0xc] sm:$0xf]
  %v32 = vld [vmem:[%s2] sm:$0x1]
  %v34 = vlaneseq
  %v35 = vshrl.u32 %v34, 7
  %v36 = vsub.s32 0, %v35
  %v37 = vrot.slane %v32, %v36
  %v52 = vunpack.c.l.b16 %v15
  %v53 = vunpack.c.l.b16 %v16
  %v54 = vunpack.c.l.b16 %v17
  %v55 = vunpack.c.l.b16 %v18
  %v56 = vunpack.c.l.b16 %v19
  %v57 = vunpack.c.l.b16 %v20
  %v58 = vunpack.c.l.b16 %v21
  %v59 = vunpack.c.l.b16 %v22
  %v60 = vunpack.c.l.b16 %v23
  %v61 = vunpack.c.l.b16 %v24
  %v62 = vunpack.c.l.b16 %v25
  %v63 = vunpack.c.l.b16 %v26
  %v64 = vunpack.c.l.b16 %v27
  %v65 = vpack.c.b16 %v53, %v52
  %v66 = vpack.c.b16 %v55, %v54
  %v67 = vpack.c.b16 %v57, %v56
  %v68 = vpack.c.b16 %v59, %v58
  %v69 = vpack.c.b16 %v61, %v60
  %v70 = vpack.c.b16 %v63, %v62
  %v71 = vpack.c.b16 %v64, %v64
  %v76 = vunpack.c.l.b16 %v28
  %v77 = vunpack.c.l.b16 %v29
  %v78 = vunpack.c.l.b16 %v30
  %v79 = vunpack.c.l.b16 %v31
  %v80 = vpack.c.b16 %v77, %v76
  %v81 = vpack.c.b16 %v79, %v78
  %vm84 = vcmask 261120
  %v86 = vsel %vm84, %v65, 0
  %v89 = vsel %vm84, %v66, 0
  %v92 = vsel %vm84, %v67, 0
  %v95 = vsel %vm84, %v68, 0
  %v98 = vsel %vm84, %v69, 0
  %v101 = vsel %vm84, %v70, 0
  %v104 = vsel %vm84, %v71, 0
  %106 = vmatprep.subr.bf16.mxu0 0
  %107 = vmatpush1.bf16.msra.mxu0 %v80
  %108 = vmatprep.subr.bf16.mxu0 0
  %109 = vmatpush1.bf16.msra.mxu0 %v81
  %110 = vmatprep.subr.bf16.mxu0 0
  %111 = vmatpush1.bf16.msra.mxu0 0
  %112 = vmatprep.subr.bf16.mxu0 0
  %113 = vmatpush1.bf16.msra.mxu0 0
  %114 = vmatprep.subr.bf16.mxu0 0
  %115 = vmatpush1.bf16.msra.mxu0 0
  %116 = vmatprep.subr.bf16.mxu0 0
  %117 = vmatpush1.bf16.msra.mxu0 0
  %118 = vmatprep.subr.bf16.mxu0 0
  %119 = vmatpush1.bf16.msra.mxu0 0
  %120 = vmatprep.subr.bf16.mxu0 0
  %121 = vmatpush1.bf16.msra.mxu0 0
  %122 = vmatprep.subr.bf16.mxu0 0
  %123 = vmatpush1.bf16.msra.mxu0 0
  %124 = vmatprep.subr.bf16.mxu0 0
  %125 = vmatpush1.bf16.msra.mxu0 0
  %126 = vmatprep.subr.bf16.mxu0 0
  %127 = vmatpush1.bf16.msra.mxu0 0
  %128 = vmatprep.subr.bf16.mxu0 0
  %129 = vmatpush1.bf16.msra.mxu0 0
  %130 = vmatprep.subr.bf16.mxu0 0
  %131 = vmatpush1.bf16.msra.mxu0 0
  %132 = vmatprep.subr.bf16.mxu0 0
  %133 = vmatpush1.bf16.msra.mxu0 0
  %134 = vmatprep.subr.bf16.mxu0 0
  %135 = vmatpush1.bf16.msra.mxu0 0
  %136 = vmatprep.subr.bf16.mxu0 0
  %137 = vmatpush1.bf16.msra.mxu0 0
  %138 = vmatprep.mubr.bf16.mxu0 0
  %139 = vmatmul.mubr.bf16.gmra.mrb[0].mxu0 %v86
  %v140 = vpop.f32.mrb[0].mxu0
  %v141 = vadd.f32 %v37, %v140
  %v142 = vpop.f32.mrb[0].mxu0
  %v143 = vpop.f32.mrb[0].mxu0
  %v144 = vadd.f32 %v37, %v143
  %v145 = vpop.f32.mrb[0].mxu0
  %146 = vmatprep.mubr.bf16.mxu0 0
  %147 = vmatmul.mubr.bf16.gmra.mrb[0].mxu0 %v89
  %v148 = vpop.f32.mrb[0].mxu0
  %v149 = vadd.f32 %v37, %v148
  %v150 = vpop.f32.mrb[0].mxu0
  %v151 = vpop.f32.mrb[0].mxu0
  %v152 = vadd.f32 %v37, %v151
  %v153 = vpop.f32.mrb[0].mxu0
  %154 = vmatprep.mubr.bf16.mxu0 0
  %155 = vmatmul.mubr.bf16.gmra.mrb[0].mxu0 %v92
  %v156 = vpop.f32.mrb[0].mxu0
  %v157 = vadd.f32 %v37, %v156
  %v158 = vpop.f32.mrb[0].mxu0
  %v159 = vpop.f32.mrb[0].mxu0
  %v160 = vadd.f32 %v37, %v159
  %v161 = vpop.f32.mrb[0].mxu0
  %162 = vmatprep.mubr.bf16.mxu0 0
  %163 = vmatmul.mubr.bf16.gmra.mrb[0].mxu0 %v95
  %v164 = vpop.f32.mrb[0].mxu0
  %v165 = vadd.f32 %v37, %v164
  %v166 = vpop.f32.mrb[0].mxu0
  %v167 = vpop.f32.mrb[0].mxu0
  %v168 = vadd.f32 %v37, %v167
  %v169 = vpop.f32.mrb[0].mxu0
  %170 = vmatprep.mubr.bf16.mxu0 0
  %171 = vmatmul.mubr.bf16.gmra.mrb[0].mxu0 %v98
  %v172 = vpop.f32.mrb[0].mxu0
  %v173 = vadd.f32 %v37, %v172
  %v174 = vpop.f32.mrb[0].mxu0
  %v175 = vpop.f32.mrb[0].mxu0
  %v176 = vadd.f32 %v37, %v175
  %v177 = vpop.f32.mrb[0].mxu0
  %178 = vmatprep.mubr.bf16.mxu0 0
  %179 = vmatmul.mubr.bf16.gmra.mrb[0].mxu0 %v101
  %v180 = vpop.f32.mrb[0].mxu0
  %v181 = vadd.f32 %v37, %v180
  %v182 = vpop.f32.mrb[0].mxu0
  %v183 = vpop.f32.mrb[0].mxu0
  %v184 = vadd.f32 %v37, %v183
  %v185 = vpop.f32.mrb[0].mxu0
  %186 = vmatprep.mubr.bf16.mxu0 0
  %187 = vmatmul.mubr.bf16.gmra.mrb[0].mxu0 %v104
  %v188 = vpop.f32.mrb[0].mxu0
  %v189 = vadd.f32 %v37, %v188
  %v190 = vpop.f32.mrb[0].mxu0
  %v191 = vpop.f32.mrb[0].mxu0
  %v192 = vpop.f32.mrb[0].mxu0
  %193 = vdwg.mxu0
  %v194 = vmax.f32 %v141, 0.0
  %v195 = vmax.f32 %v144, 0.0
  %v196 = vmax.f32 %v149, 0.0
  %v197 = vmax.f32 %v152, 0.0
  %v198 = vmax.f32 %v157, 0.0
  %v199 = vmax.f32 %v160, 0.0
  %v200 = vmax.f32 %v165, 0.0
  %v201 = vmax.f32 %v168, 0.0
  %v202 = vmax.f32 %v173, 0.0
  %v203 = vmax.f32 %v176, 0.0
  %v204 = vmax.f32 %v181, 0.0
  %v205 = vmax.f32 %v184, 0.0
  %v206 = vmax.f32 %v189, 0.0
  %207 = vst [vmem:[%s3] sm:$0xff] %v194
  %208 = vst [vmem:[%s3 + $0x8] sm:$0xff] %v195
  %209 = vst [vmem:[%s3 + $0x10] sm:$0xff] %v196
  %210 = vst [vmem:[%s3 + $0x18] sm:$0xff] %v197
  %211 = vst [vmem:[%s3 + $0x20] sm:$0xff] %v198
  %212 = vst [vmem:[%s3 + $0x28] sm:$0xff] %v199
  %213 = vst [vmem:[%s3 + $0x30] sm:$0xff] %v200
  %214 = vst [vmem:[%s3 + $0x38] sm:$0xff] %v201
  %215 = vst [vmem:[%s3 + $0x40] sm:$0xff] %v202
  %216 = vst [vmem:[%s3 + $0x48] sm:$0xff] %v203
  %217 = vst [vmem:[%s3 + $0x50] sm:$0xff] %v204
  %218 = vst [vmem:[%s3 + $0x58] sm:$0xff] %v205
  %219 = vst [vmem:[%s3 + $0x60] sm:$0xff] %v206
  // Predicated region
  $region14: #{inception_feature_extractor.10} parent=0 // pred_check
    _
  $region15: #{inception_feature_extractor.10} parent=0 // pred_check_branch
    %221 = sbr.rel (0) target = $region17
  $region16: #{inception_feature_extractor.10} parent=0 // pred_region
    _
  $region17: #{inception_feature_extractor.10} parent=0 // pred_fallthru
    _
  // Predicated region
  $region18: #{inception_feature_extractor.10} parent=0 // pred_check
    _
  $region19: #{inception_feature_extractor.10} parent=0 // pred_check_branch
    %223 = sbr.rel (0) target = $region21
  $region20: #{inception_feature_extractor.10} parent=0 // pred_region
    _
  $region21: #{inception_feature_extractor.10} parent=0 // pred_fallthru
    _

// kernel: inception_feature_extractor.11
$region0: #{inception_feature_extractor.11}
  #allocation0 [shape = 'u32[]', space=smem, size = 0x4, offset = 0x4, fixed_abs, tag = 'smem constant byte address 0x4 - core index']
  #allocation1 [shape = 'u32[144,128]{1,0:T(1,128)}', space=vmem, size = 0x12000, scoped, tag = 'internal scratch']
  %s0 = inlined_call_operand.vmem [shape: bf16[56,80], index: 0, kind: input, shape index: {}]
  %s1 = inlined_call_operand.vmem [shape: bf16[80,128], index: 1, kind: input, shape index: {}]
  %s2 = inlined_call_operand.vmem [shape: f32[1,128], index: 2, kind: input, shape index: {}]
  %s3 = inlined_call_operand.vmem [shape: f32[56,128], index: 3, kind: output, shape index: {}]
  %s4 = sld [smem:[#allocation0]]
  $region22: #{inception_feature_extractor.11} parent=0
    _
  %s6 = ssub.s32 1, %s4
  %s7 = scalar_select 0, %s6, %s4
  // Predicated region
  $region2: #{inception_feature_extractor.11} parent=0 // pred_check
    _
  $region3: #{inception_feature_extractor.11} parent=0 // pred_check_branch
    %9 = sbr.rel (0) target = $region5
  $region4: #{inception_feature_extractor.11} parent=0 // pred_region
    _
  $region5: #{inception_feature_extractor.11} parent=0 // pred_fallthru
    _
  // Predicated region
  $region6: #{inception_feature_extractor.11} parent=0 // pred_check
    _
  $region7: #{inception_feature_extractor.11} parent=0 // pred_check_branch
    %11 = sbr.rel (0) target = $region9
  $region8: #{inception_feature_extractor.11} parent=0 // pred_region
    _
  $region9: #{inception_feature_extractor.11} parent=0 // pred_fallthru
    _
  // Predicated region
  $region10: #{inception_feature_extractor.11} parent=0 // pred_check
    _
  $region11: #{inception_feature_extractor.11} parent=0 // pred_check_branch
    %13 = sbr.rel (0) target = $region13
  $region12: #{inception_feature_extractor.11} parent=0 // pred_region
    _
  $region13: #{inception_feature_extractor.11} parent=0 // pred_fallthru
    _
  %v15 = vld [vmem:[%s0] sm:$0xf]
  %v16 = vld [vmem:[%s0 + $0x4] sm:$0xf]
  %v17 = vld [vmem:[%s0 + $0x8] sm:$0xf]
  %v18 = vld [vmem:[%s0 + $0xc] sm:$0xf]
  %v19 = vld [vmem:[%s0 + $0x10] sm:$0xf]
  %v20 = vld [vmem:[%s0 + $0x14] sm:$0xf]
  %v21 = vld [vmem:[%s0 + $0x18] sm:$0xf]
  %v22 = vld [vmem:[%s1] sm:$0xf]
  %v23 = vld [vmem:[%s1 + $0x4] sm:$0xf]
  %v24 = vld [vmem:[%s1 + $0x8] sm:$0xf]
  %v25 = vld [vmem:[%s1 + $0xc] sm:$0xf]
  %v26 = vld [vmem:[%s1 + $0x10] sm:$0xf]
  %v27 = vld [vmem:[%s1 + $0x14] sm:$0xf]
  %v28 = vld [vmem:[%s1 + $0x18] sm:$0xf]
  %v29 = vld [vmem:[%s1 + $0x1c] sm:$0xf]
  %v30 = vld [vmem:[%s1 + $0x20] sm:$0xf]
  %v31 = vld [vmem:[%s1 + $0x24] sm:$0xf]
  %v32 = vld [vmem:[%s2] sm:$0x1]
  %v34 = vlaneseq
  %v35 = vshrl.u32 %v34, 7
  %v36 = vsub.s32 0, %v35
  %v37 = vrot.slane %v32, %v36
  %v46 = vunpack.c.l.b16 %v15
  %v47 = vunpack.c.l.b16 %v16
  %v48 = vunpack.c.l.b16 %v17
  %v49 = vunpack.c.l.b16 %v18
  %v50 = vunpack.c.l.b16 %v19
  %v51 = vunpack.c.l.b16 %v20
  %v52 = vunpack.c.l.b16 %v21
  %v53 = vpack.c.b16 %v47, %v46
  %v54 = vpack.c.b16 %v49, %v48
  %v55 = vpack.c.b16 %v51, %v50
  %v56 = vpack.c.b16 %v52, %v52
  %v67 = vunpack.c.l.b16 %v22
  %v68 = vunpack.c.l.b16 %v23
  %v69 = vunpack.c.l.b16 %v24
  %v70 = vunpack.c.l.b16 %v25
  %v71 = vunpack.c.l.b16 %v26
  %v72 = vunpack.c.l.b16 %v27
  %v73 = vunpack.c.l.b16 %v28
  %v74 = vunpack.c.l.b16 %v29
  %v75 = vunpack.c.l.b16 %v30
  %v76 = vunpack.c.l.b16 %v31
  %v77 = vpack.c.b16 %v68, %v67
  %v78 = vpack.c.b16 %v70, %v69
  %v79 = vpack.c.b16 %v72, %v71
  %v80 = vpack.c.b16 %v74, %v73
  %v81 = vpack.c.b16 %v76, %v75
  %vm87 = vcmask 654336
  %v89 = vsel %vm87, %v53, 0
  %v92 = vsel %vm87, %v54, 0
  %v95 = vsel %vm87, %v55, 0
  %v98 = vsel %vm87, %v56, 0
  %100 = vmatprep.subr.bf16.mxu0 0
  %101 = vmatpush1.bf16.msra.mxu0 %v77
  %102 = vmatprep.subr.bf16.mxu0 0
  %103 = vmatpush1.bf16.msra.mxu0 %v78
  %104 = vmatprep.subr.bf16.mxu0 0
  %105 = vmatpush1.bf16.msra.mxu0 %v79
  %106 = vmatprep.subr.bf16.mxu0 0
  %107 = vmatpush1.bf16.msra.mxu0 %v80
  %108 = vmatprep.subr.bf16.mxu0 0
  %109 = vmatpush1.bf16.msra.mxu0 %v81
  %110 = vmatprep.subr.bf16.mxu0 0
  %111 = vmatpush1.bf16.msra.mxu0 0
  %112 = vmatprep.subr.bf16.mxu0 0
  %113 = vmatpush1.bf16.msra.mxu0 0
  %114 = vmatprep.subr.bf16.mxu0 0
  %115 = vmatpush1.bf16.msra.mxu0 0
  %116 = vmatprep.subr.bf16.mxu0 0
  %117 = vmatpush1.bf16.msra.mxu0 0
  %118 = vmatprep.subr.bf16.mxu0 0
  %119 = vmatpush1.bf16.msra.mxu0 0
  %120 = vmatprep.subr.bf16.mxu0 0
  %121 = vmatpush1.bf16.msra.mxu0 0
  %122 = vmatprep.subr.bf16.mxu0 0
  %123 = vmatpush1.bf16.msra.mxu0 0
  %124 = vmatprep.subr.bf16.mxu0 0
  %125 = vmatpush1.bf16.msra.mxu0 0
  %126 = vmatprep.subr.bf16.mxu0 0
  %127 = vmatpush1.bf16.msra.mxu0 0
  %128 = vmatprep.subr.bf16.mxu0 0
  %129 = vmatpush1.bf16.msra.mxu0 0
  %130 = vmatprep.subr.bf16.mxu0 0
  %131 = vmatpush1.bf16.msra.mxu0 0
  %132 = vmatprep.mubr.bf16.mxu0 0
  %133 = vmatmul.mubr.bf16.gmra.mrb[0].mxu0 %v89
  %v134 = vpop.f32.mrb[0].mxu0
  %v135 = vadd.f32 %v37, %v134
  %v136 = vpop.f32.mrb[0].mxu0
  %v137 = vpop.f32.mrb[0].mxu0
  %v138 = vadd.f32 %v37, %v137
  %v139 = vpop.f32.mrb[0].mxu0
  %140 = vmatprep.mubr.bf16.mxu0 0
  %141 = vmatmul.mubr.bf16.gmra.mrb[0].mxu0 %v92
  %v142 = vpop.f32.mrb[0].mxu0
  %v143 = vadd.f32 %v37, %v142
  %v144 = vpop.f32.mrb[0].mxu0
  %v145 = vpop.f32.mrb[0].mxu0
  %v146 = vadd.f32 %v37, %v145
  %v147 = vpop.f32.mrb[0].mxu0
  %148 = vmatprep.mubr.bf16.mxu0 0
  %149 = vmatmul.mubr.bf16.gmra.mrb[0].mxu0 %v95
  %v150 = vpop.f32.mrb[0].mxu0
  %v151 = vadd.f32 %v37, %v150
  %v152 = vpop.f32.mrb[0].mxu0
  %v153 = vpop.f32.mrb[0].mxu0
  %v154 = vadd.f32 %v37, %v153
  %v155 = vpop.f32.mrb[0].mxu0
  %156 = vmatprep.mubr.bf16.mxu0 0
  %157 = vmatmul.mubr.bf16.gmra.mrb[0].mxu0 %v98
  %v158 = vpop.f32.mrb[0].mxu0
  %v159 = vadd.f32 %v37, %v158
  %v160 = vpop.f32.mrb[0].mxu0
  %v161 = vpop.f32.mrb[0].mxu0
  %v162 = vpop.f32.mrb[0].mxu0
  %163 = vdwg.mxu0
  %v164 = vmax.f32 %v135, 0.0
  %v165 = vmax.f32 %v138, 0.0
  %v166 = vmax.f32 %v143, 0.0
  %v167 = vmax.f32 %v146, 0.0
  %v168 = vmax.f32 %v151, 0.0
  %v169 = vmax.f32 %v154, 0.0
  %v170 = vmax.f32 %v159, 0.0
  %171 = vst [vmem:[%s3] sm:$0xff] %v164
  %172 = vst [vmem:[%s3 + $0x8] sm:$0xff] %v165
  %173 = vst [vmem:[%s3 + $0x10] sm:$0xff] %v166
  %174 = vst [vmem:[%s3 + $0x18] sm:$0xff] %v167
  %175 = vst [vmem:[%s3 + $0x20] sm:$0xff] %v168
  %176 = vst [vmem:[%s3 + $0x28] sm:$0xff] %v169
  %177 = vst [vmem:[%s3 + $0x30] sm:$0xff] %v170
  // Predicated region
  $region14: #{inception_feature_extractor.11} parent=0 // pred_check
    _
  $region15: #{inception_feature_extractor.11} parent=0 // pred_check_branch
    %179 = sbr.rel (0) target = $region17
  $region16: #{inception_feature_extractor.11} parent=0 // pred_region
    _
  $region17: #{inception_feature_extractor.11} parent=0 // pred_fallthru
    _
  // Predicated region
  $region18: #{inception_feature_extractor.11} parent=0 // pred_check
    _
  $region19: #{inception_feature_extractor.11} parent=0 // pred_check_branch
    %181 = sbr.rel (0) target = $region21
  $region20: #{inception_feature_extractor.11} parent=0 // pred_region
    _
  $region21: #{inception_feature_extractor.11} parent=0 // pred_fallthru
    _

// kernel: inception_feature_extractor.14
$region0: #{inception_feature_extractor.14}
  #allocation0 [shape = 'u32[]', space=smem, size = 0x4, offset = 0x4, fixed_abs, tag = 'smem constant byte address 0x4 - core index']
  #allocation1 [shape = 'u32[144,128]{1,0:T(1,128)}', space=vmem, size = 0x12000, scoped, tag = 'internal scratch']
  %s0 = inlined_call_operand.vmem [shape: bf16[8,16], index: 0, kind: input, shape index: {}]
  %s1 = inlined_call_operand.vmem [shape: bf16[16,128], index: 1, kind: input, shape index: {}]
  %s2 = inlined_call_operand.vmem [shape: f32[1,128], index: 2, kind: input, shape index: {}]
  %s3 = inlined_call_operand.vmem [shape: f32[8,128], index: 3, kind: output, shape index: {}]
  %s4 = sld [smem:[#allocation0]]
  $region22: #{inception_feature_extractor.14} parent=0
    _
  %s6 = ssub.s32 1, %s4
  %s7 = scalar_select 0, %s6, %s4
  // Predicated region
  $region2: #{inception_feature_extractor.14} parent=0 // pred_check
    _
  $region3: #{inception_feature_extractor.14} parent=0 // pred_check_branch
    %9 = sbr.rel (0) target = $region5
  $region4: #{inception_feature_extractor.14} parent=0 // pred_region
    _
  $region5: #{inception_feature_extractor.14} parent=0 // pred_fallthru
    _
  // Predicated region
  $region6: #{inception_feature_extractor.14} parent=0 // pred_check
    _
  $region7: #{inception_feature_extractor.14} parent=0 // pred_check_branch
    %11 = sbr.rel (0) target = $region9
  $region8: #{inception_feature_extractor.14} parent=0 // pred_region
    _
  $region9: #{inception_feature_extractor.14} parent=0 // pred_fallthru
    _
  // Predicated region
  $region10: #{inception_feature_extractor.14} parent=0 // pred_check
    _
  $region11: #{inception_feature_extractor.14} parent=0 // pred_check_branch
    %13 = sbr.rel (0) target = $region13
  $region12: #{inception_feature_extractor.14} parent=0 // pred_region
    _
  $region13: #{inception_feature_extractor.14} parent=0 // pred_fallthru
    _
  %v15 = vld [vmem:[%s0] sm:$0xf]
  %v16 = vld [vmem:[%s1] sm:$0xf]
  %v17 = vld [vmem:[%s1 + $0x4] sm:$0xf]
  %v18 = vld [vmem:[%s2] sm:$0x1]
  %v20 = vlaneseq
  %v21 = vshrl.u32 %v20, 7
  %v22 = vsub.s32 0, %v21
  %v23 = vrot.slane %v18, %v22
  %v27 = vunpack.c.l.b16 %v16
  %v28 = vunpack.c.l.b16 %v17
  %v29 = vpack.c.b16 %v28, %v27
  %vm31 = vcmask 130048
  %v33 = vsel %vm31, %v15, 0
  %35 = vmatprep.subr.bf16.mxu0 0
  %36 = vmatpush1.bf16.msra.mxu0 %v29
  %37 = vmatprep.subr.bf16.mxu0 0
  %38 = vmatpush1.bf16.msra.mxu0 0
  %39 = vmatprep.subr.bf16.mxu0 0
  %40 = vmatpush1.bf16.msra.mxu0 0
  %41 = vmatprep.subr.bf16.mxu0 0
  %42 = vmatpush1.bf16.msra.mxu0 0
  %43 = vmatprep.subr.bf16.mxu0 0
  %44 = vmatpush1.bf16.msra.mxu0 0
  %45 = vmatprep.subr.bf16.mxu0 0
  %46 = vmatpush1.bf16.msra.mxu0 0
  %47 = vmatprep.subr.bf16.mxu0 0
  %48 = vmatpush1.bf16.msra.mxu0 0
  %49 = vmatprep.subr.bf16.mxu0 0
  %50 = vmatpush1.bf16.msra.mxu0 0
  %51 = vmatprep.subr.bf16.mxu0 0
  %52 = vmatpush1.bf16.msra.mxu0 0
  %53 = vmatprep.subr.bf16.mxu0 0
  %54 = vmatpush1.bf16.msra.mxu0 0
  %55 = vmatprep.subr.bf16.mxu0 0
  %56 = vmatpush1.bf16.msra.mxu0 0
  %57 = vmatprep.subr.bf16.mxu0 0
  %58 = vmatpush1.bf16.msra.mxu0 0
  %59 = vmatprep.subr.bf16.mxu0 0
  %60 = vmatpush1.bf16.msra.mxu0 0
  %61 = vmatprep.subr.bf16.mxu0 0
  %62 = vmatpush1.bf16.msra.mxu0 0
  %63 = vmatprep.subr.bf16.mxu0 0
  %64 = vmatpush1.bf16.msra.mxu0 0
  %65 = vmatprep.subr.bf16.mxu0 0
  %66 = vmatpush1.bf16.msra.mxu0 0
  %67 = vmatprep.mubr.bf16.mxu0 0
  %68 = vmatmul.mubr.bf16.gmra.mrb[0].mxu0 %v33
  %v69 = vpop.f32.mrb[0].mxu0
  %v70 = vadd.f32 %v23, %v69
  %v71 = vpop.f32.mrb[0].mxu0
  %v72 = vpop.f32.mrb[0].mxu0
  %v73 = vpop.f32.mrb[0].mxu0
  %74 = vdwg.mxu0
  %v75 = vmax.f32 %v70, 0.0
  %76 = vst [vmem:[%s3] sm:$0xff] %v75
  // Predicated region
  $region14: #{inception_feature_extractor.14} parent=0 // pred_check
    _
  $region15: #{inception_feature_extractor.14} parent=0 // pred_check_branch
    %78 = sbr.rel (0) target = $region17
  $region16: #{inception_feature_extractor.14} parent=0 // pred_region
    _
  $region17: #{inception_feature_extractor.14} parent=0 // pred_fallthru
    _
  // Predicated region
  $region18: #{inception_feature_extractor.14} parent=0 // pred_check
    _
  $region19: #{inception_feature_extractor.14} parent=0 // pred_check_branch
    %80 = sbr.rel (0) target = $region21
  $region20: #{inception_feature_extractor.14} parent=0 // pred_region
    _
  $region21: #{inception_feature_extractor.14} parent=0 // pred_fallthru
    _

// kernel: inception_feature_extractor.13
$region0: #{inception_feature_extractor.13}
  #allocation0 [shape = 'u32[]', space=smem, size = 0x4, offset = 0x4, fixed_abs, tag = 'smem constant byte address 0x4 - core index']
  #allocation1 [shape = 'u32[144,128]{1,0:T(1,128)}', space=vmem, size = 0x12000, scoped, tag = 'internal scratch']
  %s0 = inlined_call_operand.vmem [shape: f32[8,9,128], index: 0, kind: input, shape index: {}]
  %s1 = inlined_call_operand.vmem [shape: f32[8,128], index: 1, kind: output, shape index: {}]
  %s2 = sld [smem:[#allocation0]]
  $region14: #{inception_feature_extractor.13} parent=0
    _
  %s4 = ssub.s32 1, %s2
  %s5 = scalar_select 0, %s4, %s2
  // Predicated region
  $region2: #{inception_feature_extractor.13} parent=0 // pred_check
    _
  $region3: #{inception_feature_extractor.13} parent=0 // pred_check_branch
    %7 = sbr.rel (0) target = $region5
  $region4: #{inception_feature_extractor.13} parent=0 // pred_region
    _
  $region5: #{inception_feature_extractor.13} parent=0 // pred_fallthru
    _
  %v8 = vld [vmem:[%s0] sm:$0xff]
  %v9 = vld [vmem:[%s0 + $0x8] sm:$0x1]
  %v10 = vld [vmem:[%s0 + $0x10] sm:$0xff]
  %v11 = vld [vmem:[%s0 + $0x18] sm:$0x1]
  %v12 = vld [vmem:[%s0 + $0x20] sm:$0xff]
  %v13 = vld [vmem:[%s0 + $0x28] sm:$0x1]
  %v14 = vld [vmem:[%s0 + $0x30] sm:$0xff]
  %v15 = vld [vmem:[%s0 + $0x38] sm:$0x1]
  %v16 = vld [vmem:[%s0 + $0x40] sm:$0xff]
  %v17 = vld [vmem:[%s0 + $0x48] sm:$0x1]
  %v18 = vld [vmem:[%s0 + $0x50] sm:$0xff]
  %v19 = vld [vmem:[%s0 + $0x58] sm:$0x1]
  %v20 = vld [vmem:[%s0 + $0x60] sm:$0xff]
  %v21 = vld [vmem:[%s0 + $0x68] sm:$0x1]
  %v22 = vld [vmem:[%s0 + $0x70] sm:$0xff]
  %v23 = vld [vmem:[%s0 + $0x78] sm:$0x1]
  %v32 = vrot.slane %v8, 1
  %v33 = vrot.slane %v10, 1
  %v34 = vrot.slane %v12, 1
  %v35 = vrot.slane %v14, 1
  %v36 = vrot.slane %v16, 1
  %v37 = vrot.slane %v18, 1
  %v38 = vrot.slane %v20, 1
  %v39 = vrot.slane %v22, 1
  %v48 = vmax.f32 %v8, %v32
  %v49 = vmax.f32 %v10, %v33
  %v50 = vmax.f32 %v12, %v34
  %v51 = vmax.f32 %v14, %v35
  %v52 = vmax.f32 %v16, %v36
  %v53 = vmax.f32 %v18, %v37
  %v54 = vmax.f32 %v20, %v38
  %v55 = vmax.f32 %v22, %v39
  %v56 = vrot.slane %v8, 2
  %v57 = vrot.slane %v10, 2
  %v58 = vrot.slane %v12, 2
  %v59 = vrot.slane %v14, 2
  %v60 = vrot.slane %v16, 2
  %v61 = vrot.slane %v18, 2
  %v62 = vrot.slane %v20, 2
  %v63 = vrot.slane %v22, 2
  %v72 = vmax.f32 %v48, %v56
  %v73 = vmax.f32 %v49, %v57
  %v74 = vmax.f32 %v50, %v58
  %v75 = vmax.f32 %v51, %v59
  %v76 = vmax.f32 %v52, %v60
  %v77 = vmax.f32 %v53, %v61
  %v78 = vmax.f32 %v54, %v62
  %v79 = vmax.f32 %v55, %v63
  %v80 = vrot.slane %v8, 3
  %v81 = vrot.slane %v10, 3
  %v82 = vrot.slane %v12, 3
  %v83 = vrot.slane %v14, 3
  %v84 = vrot.slane %v16, 3
  %v85 = vrot.slane %v18, 3
  %v86 = vrot.slane %v20, 3
  %v87 = vrot.slane %v22, 3
  %v96 = vmax.f32 %v72, %v80
  %v97 = vmax.f32 %v73, %v81
  %v98 = vmax.f32 %v74, %v82
  %v99 = vmax.f32 %v75, %v83
  %v100 = vmax.f32 %v76, %v84
  %v101 = vmax.f32 %v77, %v85
  %v102 = vmax.f32 %v78, %v86
  %v103 = vmax.f32 %v79, %v87
  %v104 = vrot.slane %v8, 4
  %v105 = vrot.slane %v10, 4
  %v106 = vrot.slane %v12, 4
  %v107 = vrot.slane %v14, 4
  %v108 = vrot.slane %v16, 4
  %v109 = vrot.slane %v18, 4
  %v110 = vrot.slane %v20, 4
  %v111 = vrot.slane %v22, 4
  %v120 = vmax.f32 %v96, %v104
  %v121 = vmax.f32 %v97, %v105
  %v122 = vmax.f32 %v98, %v106
  %v123 = vmax.f32 %v99, %v107
  %v124 = vmax.f32 %v100, %v108
  %v125 = vmax.f32 %v101, %v109
  %v126 = vmax.f32 %v102, %v110
  %v127 = vmax.f32 %v103, %v111
  %v128 = vrot.slane %v8, 5
  %v129 = vrot.slane %v10, 5
  %v130 = vrot.slane %v12, 5
  %v131 = vrot.slane %v14, 5
  %v132 = vrot.slane %v16, 5
  %v133 = vrot.slane %v18, 5
  %v134 = vrot.slane %v20, 5
  %v135 = vrot.slane %v22, 5
  %v144 = vmax.f32 %v120, %v128
  %v145 = vmax.f32 %v121, %v129
  %v146 = vmax.f32 %v122, %v130
  %v147 = vmax.f32 %v123, %v131
  %v148 = vmax.f32 %v124, %v132
  %v149 = vmax.f32 %v125, %v133
  %v150 = vmax.f32 %v126, %v134
  %v151 = vmax.f32 %v127, %v135
  %v152 = vrot.slane %v8, 6
  %v153 = vrot.slane %v10, 6
  %v154 = vrot.slane %v12, 6
  %v155 = vrot.slane %v14, 6
  %v156 = vrot.slane %v16, 6
  %v157 = vrot.slane %v18, 6
  %v158 = vrot.slane %v20, 6
  %v159 = vrot.slane %v22, 6
  %v168 = vmax.f32 %v144, %v152
  %v169 = vmax.f32 %v145, %v153
  %v170 = vmax.f32 %v146, %v154
  %v171 = vmax.f32 %v147, %v155
  %v172 = vmax.f32 %v148, %v156
  %v173 = vmax.f32 %v149, %v157
  %v174 = vmax.f32 %v150, %v158
  %v175 = vmax.f32 %v151, %v159
  %v176 = vrot.slane %v8, 7
  %v177 = vrot.slane %v10, 7
  %v178 = vrot.slane %v12, 7
  %v179 = vrot.slane %v14, 7
  %v180 = vrot.slane %v16, 7
  %v181 = vrot.slane %v18, 7
  %v182 = vrot.slane %v20, 7
  %v183 = vrot.slane %v22, 7
  %v192 = vmax.f32 %v168, %v176
  %v193 = vmax.f32 %v169, %v177
  %v194 = vmax.f32 %v170, %v178
  %v195 = vmax.f32 %v171, %v179
  %v196 = vmax.f32 %v172, %v180
  %v197 = vmax.f32 %v173, %v181
  %v198 = vmax.f32 %v174, %v182
  %v199 = vmax.f32 %v175, %v183
  %v200 = vmax.f32 %v192, %v9
  %v201 = vmax.f32 %v193, %v11
  %v202 = vmax.f32 %v194, %v13
  %v203 = vmax.f32 %v195, %v15
  %v204 = vmax.f32 %v196, %v17
  %v205 = vmax.f32 %v197, %v19
  %v206 = vmax.f32 %v198, %v21
  %v207 = vmax.f32 %v199, %v23
  %v216 = vrot.slane %v201, 7
  %vm217 = vcmask 1041409
  %v218 = vsel %vm217, %v216, %v200
  %v219 = vrot.slane %v202, 6
  %vm220 = vcmask 1042434
  %v221 = vsel %vm220, %v219, %v218
  %v222 = vrot.slane %v203, 5
  %vm223 = vcmask 1043459
  %v224 = vsel %vm223, %v222, %v221
  %v225 = vrot.slane %v204, 4
  %vm226 = vcmask 1044484
  %v227 = vsel %vm226, %v225, %v224
  %v228 = vrot.slane %v205, 3
  %vm229 = vcmask 1045509
  %v230 = vsel %vm229, %v228, %v227
  %v231 = vrot.slane %v206, 2
  %vm232 = vcmask 1046534
  %v233 = vsel %vm232, %v231, %v230
  %v234 = vrot.slane %v207, 1
  %vm235 = vcmask 1047559
  %v236 = vsel %vm235, %v234, %v233
  %238 = vst [vmem:[%s1] sm:$0xff] %v236
  // Predicated region
  $region6: #{inception_feature_extractor.13} parent=0 // pred_check
    _
  $region7: #{inception_feature_extractor.13} parent=0 // pred_check_branch
    %240 = sbr.rel (0) target = $region9
  $region8: #{inception_feature_extractor.13} parent=0 // pred_region
    _
  $region9: #{inception_feature_extractor.13} parent=0 // pred_fallthru
    _
  // Predicated region
  $region10: #{inception_feature_extractor.13} parent=0 // pred_check
    _
  $region11: #{inception_feature_extractor.13} parent=0 // pred_check_branch
    %242 = sbr.rel (0) target = $region13
  $region12: #{inception_feature_extractor.13} parent=0 // pred_region
    _
  $region13: #{inception_feature_extractor.13} parent=0 // pred_fallthru
    _

// kernel: inception_feature_extractor.15
$region0: #{inception_feature_extractor.15}
  #allocation0 [shape = 'u32[]', space=smem, size = 0x4, offset = 0x4, fixed_abs, tag = 'smem constant byte address 0x4 - core index']
  #allocation1 [shape = 'u32[144,128]{1,0:T(1,128)}', space=vmem, size = 0x12000, scoped, tag = 'internal scratch']
  %s0 = inlined_call_operand.vmem [shape: bf16[8,144], index: 0, kind: input, shape index: {}]
  %s1 = inlined_call_operand.vmem [shape: bf16[144,128], index: 1, kind: input, shape index: {}]
  %s2 = inlined_call_operand.vmem [shape: f32[1,128], index: 2, kind: input, shape index: {}]
  %s3 = inlined_call_operand.vmem [shape: f32[8,128], index: 3, kind: output, shape index: {}]
  %s4 = sld [smem:[#allocation0]]
  $region22: #{inception_feature_extractor.15} parent=0
    _
  %s6 = ssub.s32 1, %s4
  %s7 = scalar_select 0, %s6, %s4
  // Predicated region
  $region2: #{inception_feature_extractor.15} parent=0 // pred_check
    _
  $region3: #{inception_feature_extractor.15} parent=0 // pred_check_branch
    %9 = sbr.rel (0) target = $region5
  $region4: #{inception_feature_extractor.15} parent=0 // pred_region
    _
  $region5: #{inception_feature_extractor.15} parent=0 // pred_fallthru
    _
  // Predicated region
  $region6: #{inception_feature_extractor.15} parent=0 // pred_check
    _
  $region7: #{inception_feature_extractor.15} parent=0 // pred_check_branch
    %11 = sbr.rel (0) target = $region9
  $region8: #{inception_feature_extractor.15} parent=0 // pred_region
    _
  $region9: #{inception_feature_extractor.15} parent=0 // pred_fallthru
    _
  // Predicated region
  $region10: #{inception_feature_extractor.15} parent=0 // pred_check
    _
  $region11: #{inception_feature_extractor.15} parent=0 // pred_check_branch
    %13 = sbr.rel (0) target = $region13
  $region12: #{inception_feature_extractor.15} parent=0 // pred_region
    _
  $region13: #{inception_feature_extractor.15} parent=0 // pred_fallthru
    _
  %v15 = vld [vmem:[%s0] sm:$0xff]
  %v16 = vld [vmem:[%s1] sm:$0xf]
  %v17 = vld [vmem:[%s1 + $0x4] sm:$0xf]
  %v18 = vld [vmem:[%s1 + $0x8] sm:$0xf]
  %v19 = vld [vmem:[%s1 + $0xc] sm:$0xf]
  %v20 = vld [vmem:[%s1 + $0x10] sm:$0xf]
  %v21 = vld [vmem:[%s1 + $0x14] sm:$0xf]
  %v22 = vld [vmem:[%s1 + $0x18] sm:$0xf]
  %v23 = vld [vmem:[%s1 + $0x1c] sm:$0xf]
  %v24 = vld [vmem:[%s1 + $0x20] sm:$0xf]
  %v25 = vld [vmem:[%s1 + $0x24] sm:$0xf]
  %v26 = vld [vmem:[%s1 + $0x28] sm:$0xf]
  %v27 = vld [vmem:[%s1 + $0x2c] sm:$0xf]
  %v28 = vld [vmem:[%s1 + $0x30] sm:$0xf]
  %v29 = vld [vmem:[%s1 + $0x34] sm:$0xf]
  %v30 = vld [vmem:[%s1 + $0x38] sm:$0xf]
  %v31 = vld [vmem:[%s1 + $0x3c] sm:$0xf]
  %v32 = vld [vmem:[%s1 + $0x40] sm:$0xf]
  %v33 = vld [vmem:[%s1 + $0x44] sm:$0xf]
  %v34 = vld [vmem:[%s2] sm:$0x1]
  %v36 = vlaneseq
  %v37 = vshrl.u32 %v36, 7
  %v38 = vsub.s32 0, %v37
  %v39 = vrot.slane %v34, %v38
  %v42 = vunpack.c.l.b16 %v15
  %v43 = vunpack.c.h.b16 %v15
  %v44 = vpack.c.b16 %v42, %v42
  %v45 = vpack.c.b16 %v43, %v43
  %v65 = vunpack.c.l.b16 %v16
  %v66 = vunpack.c.l.b16 %v17
  %v67 = vunpack.c.l.b16 %v18
  %v68 = vunpack.c.l.b16 %v19
  %v69 = vunpack.c.l.b16 %v20
  %v70 = vunpack.c.l.b16 %v21
  %v71 = vunpack.c.l.b16 %v22
  %v72 = vunpack.c.l.b16 %v23
  %v73 = vunpack.c.l.b16 %v24
  %v74 = vunpack.c.l.b16 %v25
  %v75 = vunpack.c.l.b16 %v26
  %v76 = vunpack.c.l.b16 %v27
  %v77 = vunpack.c.l.b16 %v28
  %v78 = vunpack.c.l.b16 %v29
  %v79 = vunpack.c.l.b16 %v30
  %v80 = vunpack.c.l.b16 %v31
  %v81 = vunpack.c.l.b16 %v32
  %v82 = vunpack.c.l.b16 %v33
  %v83 = vpack.c.b16 %v66, %v65
  %v84 = vpack.c.b16 %v68, %v67
  %v85 = vpack.c.b16 %v70, %v69
  %v86 = vpack.c.b16 %v72, %v71
  %v87 = vpack.c.b16 %v74, %v73
  %v88 = vpack.c.b16 %v76, %v75
  %v89 = vpack.c.b16 %v78, %v77
  %v90 = vpack.c.b16 %v80, %v79
  %v91 = vpack.c.b16 %v82, %v81
  %vm101 = vcmask 130048
  %v103 = vsel %vm101, %v45, 0
  %105 = vmatprep.subr.bf16.mxu0 0
  %106 = vmatpush1.bf16.msra.mxu0 %v83
  %107 = vmatprep.subr.bf16.mxu0 0
  %108 = vmatpush1.bf16.msra.mxu0 %v84
  %109 = vmatprep.subr.bf16.mxu0 0
  %110 = vmatpush1.bf16.msra.mxu0 %v85
  %111 = vmatprep.subr.bf16.mxu0 0
  %112 = vmatpush1.bf16.msra.mxu0 %v86
  %113 = vmatprep.subr.bf16.mxu0 0
  %114 = vmatpush1.bf16.msra.mxu0 %v87
  %115 = vmatprep.subr.bf16.mxu0 0
  %116 = vmatpush1.bf16.msra.mxu0 %v88
  %117 = vmatprep.subr.bf16.mxu0 0
  %118 = vmatpush1.bf16.msra.mxu0 %v89
  %119 = vmatprep.subr.bf16.mxu0 0
  %120 = vmatpush1.bf16.msra.mxu0 %v90
  %121 = vmatprep.subr.bf16.mxu0 0
  %122 = vmatpush1.bf16.msra.mxu0 %v91
  %123 = vmatprep.subr.bf16.mxu0 0
  %124 = vmatpush1.bf16.msra.mxu0 0
  %125 = vmatprep.subr.bf16.mxu0 0
  %126 = vmatpush1.bf16.msra.mxu0 0
  %127 = vmatprep.subr.bf16.mxu0 0
  %128 = vmatpush1.bf16.msra.mxu0 0
  %129 = vmatprep.subr.bf16.mxu0 0
  %130 = vmatpush1.bf16.msra.mxu0 0
  %131 = vmatprep.subr.bf16.mxu0 0
  %132 = vmatpush1.bf16.msra.mxu0 0
  %133 = vmatprep.subr.bf16.mxu0 0
  %134 = vmatpush1.bf16.msra.mxu0 0
  %135 = vmatprep.subr.bf16.mxu0 0
  %136 = vmatpush1.bf16.msra.mxu0 0
  %137 = vmatprep.mubr.bf16.mxu0 %v103
  %138 = vmatmul.mubr.bf16.gmra.mrb[0].mxu0 %v44
  %v139 = vpop.f32.mrb[0].mxu0
  %v140 = vadd.f32 %v39, %v139
  %v141 = vpop.f32.mrb[0].mxu0
  %v142 = vpop.f32.mrb[0].mxu0
  %v143 = vpop.f32.mrb[0].mxu0
  %144 = vdwg.mxu0
  %v145 = vmax.f32 %v140, 0.0
  %146 = vst [vmem:[%s3] sm:$0xff] %v145
  // Predicated region
  $region14: #{inception_feature_extractor.15} parent=0 // pred_check
    _
  $region15: #{inception_feature_extractor.15} parent=0 // pred_check_branch
    %148 = sbr.rel (0) target = $region17
  $region16: #{inception_feature_extractor.15} parent=0 // pred_region
    _
  $region17: #{inception_feature_extractor.15} parent=0 // pred_fallthru
    _
  // Predicated region
  $region18: #{inception_feature_extractor.15} parent=0 // pred_check
    _
  $region19: #{inception_feature_extractor.15} parent=0 // pred_check_branch
    %150 = sbr.rel (0) target = $region21
  $region20: #{inception_feature_extractor.15} parent=0 // pred_region
    _
  $region21: #{inception_feature_extractor.15} parent=0 // pred_fallthru
    _

// kernel: inception_feature_extractor.16
$region0: #{inception_feature_extractor.16}
  #allocation0 [shape = 'u32[]', space=smem, size = 0x4, offset = 0x4, fixed_abs, tag = 'smem constant byte address 0x4 - core index']
  #allocation1 [shape = 'u32[144,128]{1,0:T(1,128)}', space=vmem, size = 0x12000, scoped, tag = 'internal scratch']
  %s0 = inlined_call_operand.vmem [shape: bf16[8,288], index: 0, kind: input, shape index: {}]
  %s1 = inlined_call_operand.vmem [shape: bf16[288,128], index: 1, kind: input, shape index: {}]
  %s2 = inlined_call_operand.vmem [shape: f32[1,128], index: 2, kind: input, shape index: {}]
  %s3 = inlined_call_operand.vmem [shape: f32[8,128], index: 3, kind: output, shape index: {}]
  %s4 = sld [smem:[#allocation0]]
  $region22: #{inception_feature_extractor.16} parent=0
    _
  %s6 = ssub.s32 1, %s4
  %s7 = scalar_select 0, %s6, %s4
  // Predicated region
  $region2: #{inception_feature_extractor.16} parent=0 // pred_check
    _
  $region3: #{inception_feature_extractor.16} parent=0 // pred_check_branch
    %9 = sbr.rel (0) target = $region5
  $region4: #{inception_feature_extractor.16} parent=0 // pred_region
    _
  $region5: #{inception_feature_extractor.16} parent=0 // pred_fallthru
    _
  // Predicated region
  $region6: #{inception_feature_extractor.16} parent=0 // pred_check
    _
  $region7: #{inception_feature_extractor.16} parent=0 // pred_check_branch
    %11 = sbr.rel (0) target = $region9
  $region8: #{inception_feature_extractor.16} parent=0 // pred_region
    _
  $region9: #{inception_feature_extractor.16} parent=0 // pred_fallthru
    _
  // Predicated region
  $region10: #{inception_feature_extractor.16} parent=0 // pred_check
    _
  $region11: #{inception_feature_extractor.16} parent=0 // pred_check_branch
    %13 = sbr.rel (0) target = $region13
  $region12: #{inception_feature_extractor.16} parent=0 // pred_region
    _
  $region13: #{inception_feature_extractor.16} parent=0 // pred_fallthru
    _
  %v15 = vld [vmem:[%s0] sm:$0xff]
  %v16 = vld [vmem:[%s0 + $0x8] sm:$0xf]
  %v17 = vld [vmem:[%s1] sm:$0xf]
  %v18 = vld [vmem:[%s1 + $0x4] sm:$0xf]
  %v19 = vld [vmem:[%s1 + $0x8] sm:$0xf]
  %v20 = vld [vmem:[%s1 + $0xc] sm:$0xf]
  %v21 = vld [vmem:[%s1 + $0x10] sm:$0xf]
  %v22 = vld [vmem:[%s1 + $0x14] sm:$0xf]
  %v23 = vld [vmem:[%s1 + $0x18] sm:$0xf]
  %v24 = vld [vmem:[%s1 + $0x1c] sm:$0xf]
  %v25 = vld [vmem:[%s1 + $0x20] sm:$0xf]
  %v26 = vld [vmem:[%s1 + $0x24] sm:$0xf]
  %v27 = vld [vmem:[%s1 + $0x28] sm:$0xf]
  %v28 = vld [vmem:[%s1 + $0x2c] sm:$0xf]
  %v29 = vld [vmem:[%s1 + $0x30] sm:$0xf]
  %v30 = vld [vmem:[%s1 + $0x34] sm:$0xf]
  %v31 = vld [vmem:[%s1 + $0x38] sm:$0xf]
  %v32 = vld [vmem:[%s1 + $0x3c] sm:$0xf]
  %v33 = vld [vmem:[%s1 + $0x40] sm:$0xf]
  %v34 = vld [vmem:[%s1 + $0x44] sm:$0xf]
  %v35 = vld [vmem:[%s1 + $0x48] sm:$0xf]
  %v36 = vld [vmem:[%s1 + $0x4c] sm:$0xf]
  %v37 = vld [vmem:[%s1 + $0x50] sm:$0xf]
  %v38 = vld [vmem:[%s1 + $0x54] sm:$0xf]
  %v39 = vld [vmem:[%s1 + $0x58] sm:$0xf]
  %v40 = vld [vmem:[%s1 + $0x5c] sm:$0xf]
  %v41 = vld [vmem:[%s1 + $0x60] sm:$0xf]
  %v42 = vld [vmem:[%s1 + $0x64] sm:$0xf]
  %v43 = vld [vmem:[%s1 + $0x68] sm:$0xf]
  %v44 = vld [vmem:[%s1 + $0x6c] sm:$0xf]
  %v45 = vld [vmem:[%s1 + $0x70] sm:$0xf]
  %v46 = vld [vmem:[%s1 + $0x74] sm:$0xf]
  %v47 = vld [vmem:[%s1 + $0x78] sm:$0xf]
  %v48 = vld [vmem:[%s1 + $0x7c] sm:$0xf]
  %v49 = vld [vmem:[%s1 + $0x80] sm:$0xf]
  %v50 = vld [vmem:[%s1 + $0x84] sm:$0xf]
  %v51 = vld [vmem:[%s1 + $0x88] sm:$0xf]
  %v52 = vld [vmem:[%s1 + $0x8c] sm:$0xf]
  %v53 = vld [vmem:[%s2] sm:$0x1]
  %v55 = vlaneseq
  %v56 = vshrl.u32 %v55, 7
  %v57 = vsub.s32 0, %v56
  %v58 = vrot.slane %v53, %v57
  %v62 = vunpack.c.l.b16 %v15
  %v63 = vunpack.c.h.b16 %v15
  %v64 = vunpack.c.l.b16 %v16
  %v65 = vpack.c.b16 %v62, %v62
  %v66 = vpack.c.b16 %v63, %v63
  %v67 = vpack.c.b16 %v64, %v64
  %v106 = vunpack.c.l.b16 %v17
  %v107 = vunpack.c.l.b16 %v18
  %v108 = vunpack.c.l.b16 %v19
  %v109 = vunpack.c.l.b16 %v20
  %v110 = vunpack.c.l.b16 %v21
  %v111 = vunpack.c.l.b16 %v22
  %v112 = vunpack.c.l.b16 %v23
  %v113 = vunpack.c.l.b16 %v24
  %v114 = vunpack.c.l.b16 %v25
  %v115 = vunpack.c.l.b16 %v26
  %v116 = vunpack.c.l.b16 %v27
  %v117 = vunpack.c.l.b16 %v28
  %v118 = vunpack.c.l.b16 %v29
  %v119 = vunpack.c.l.b16 %v30
  %v120 = vunpack.c.l.b16 %v31
  %v121 = vunpack.c.l.b16 %v32
  %v122 = vunpack.c.l.b16 %v33
  %v123 = vunpack.c.l.b16 %v34
  %v124 = vunpack.c.l.b16 %v35
  %v125 = vunpack.c.l.b16 %v36
  %v126 = vunpack.c.l.b16 %v37
  %v127 = vunpack.c.l.b16 %v38
  %v128 = vunpack.c.l.b16 %v39
  %v129 = vunpack.c.l.b16 %v40
  %v130 = vunpack.c.l.b16 %v41
  %v131 = vunpack.c.l.b16 %v42
  %v132 = vunpack.c.l.b16 %v43
  %v133 = vunpack.c.l.b16 %v44
  %v134 = vunpack.c.l.b16 %v45
  %v135 = vunpack.c.l.b16 %v46
  %v136 = vunpack.c.l.b16 %v47
  %v137 = vunpack.c.l.b16 %v48
  %v138 = vunpack.c.l.b16 %v49
  %v139 = vunpack.c.l.b16 %v50
  %v140 = vunpack.c.l.b16 %v51
  %v141 = vunpack.c.l.b16 %v52
  %v142 = vpack.c.b16 %v107, %v106
  %v143 = vpack.c.b16 %v109, %v108
  %v144 = vpack.c.b16 %v111, %v110
  %v145 = vpack.c.b16 %v113, %v112
  %v146 = vpack.c.b16 %v115, %v114
  %v147 = vpack.c.b16 %v117, %v116
  %v148 = vpack.c.b16 %v119, %v118
  %v149 = vpack.c.b16 %v121, %v120
  %v150 = vpack.c.b16 %v123, %v122
  %v151 = vpack.c.b16 %v125, %v124
  %v152 = vpack.c.b16 %v127, %v126
  %v153 = vpack.c.b16 %v129, %v128
  %v154 = vpack.c.b16 %v131, %v130
  %v155 = vpack.c.b16 %v133, %v132
  %v156 = vpack.c.b16 %v135, %v134
  %v157 = vpack.c.b16 %v137, %v136
  %v158 = vpack.c.b16 %v139, %v138
  %v159 = vpack.c.b16 %v141, %v140
  %vm178 = vcmask 261120
  %v180 = vsel %vm178, %v67, 0
  %182 = vmatprep.subr.bf16.mxu0 0
  %183 = vmatpush1.bf16.msra.mxu0 %v142
  %184 = vmatprep.subr.bf16.mxu0 0
  %185 = vmatpush1.bf16.msra.mxu0 %v143
  %186 = vmatprep.subr.bf16.mxu0 0
  %187 = vmatpush1.bf16.msra.mxu0 %v144
  %188 = vmatprep.subr.bf16.mxu0 0
  %189 = vmatpush1.bf16.msra.mxu0 %v145
  %190 = vmatprep.subr.bf16.mxu0 0
  %191 = vmatpush1.bf16.msra.mxu0 %v146
  %192 = vmatprep.subr.bf16.mxu0 0
  %193 = vmatpush1.bf16.msra.mxu0 %v147
  %194 = vmatprep.subr.bf16.mxu0 0
  %195 = vmatpush1.bf16.msra.mxu0 %v148
  %196 = vmatprep.subr.bf16.mxu0 0
  %197 = vmatpush1.bf16.msra.mxu0 %v149
  %198 = vmatprep.subr.bf16.mxu0 0
  %199 = vmatpush1.bf16.msra.mxu0 %v150
  %200 = vmatprep.subr.bf16.mxu0 0
  %201 = vmatpush1.bf16.msra.mxu0 %v151
  %202 = vmatprep.subr.bf16.mxu0 0
  %203 = vmatpush1.bf16.msra.mxu0 %v152
  %204 = vmatprep.subr.bf16.mxu0 0
  %205 = vmatpush1.bf16.msra.mxu0 %v153
  %206 = vmatprep.subr.bf16.mxu0 0
  %207 = vmatpush1.bf16.msra.mxu0 %v154
  %208 = vmatprep.subr.bf16.mxu0 0
  %209 = vmatpush1.bf16.msra.mxu0 %v155
  %210 = vmatprep.subr.bf16.mxu0 0
  %211 = vmatpush1.bf16.msra.mxu0 %v156
  %212 = vmatprep.subr.bf16.mxu0 0
  %213 = vmatpush1.bf16.msra.mxu0 %v157
  %214 = vmatprep.mubr.bf16.mxu0 %v66
  %215 = vmatmul.mubr.bf16.gmra.mrb[0].mxu0 %v65
  %v216 = vpop.f32.mrb[0].mxu0
  %v217 = vadd.f32 %v58, %v216
  %v218 = vpop.f32.mrb[0].mxu0
  %v219 = vpop.f32.mrb[0].mxu0
  %v220 = vpop.f32.mrb[0].mxu0
  %221 = vdwg.mxu0
  %222 = vmatprep.subr.bf16.mxu0 0
  %223 = vmatpush1.bf16.msra.mxu0 %v158
  %224 = vmatprep.subr.bf16.mxu0 0
  %225 = vmatpush1.bf16.msra.mxu0 %v159
  %226 = vmatprep.subr.bf16.mxu0 0
  %227 = vmatpush1.bf16.msra.mxu0 0
  %228 = vmatprep.subr.bf16.mxu0 0
  %229 = vmatpush1.bf16.msra.mxu0 0
  %230 = vmatprep.subr.bf16.mxu0 0
  %231 = vmatpush1.bf16.msra.mxu0 0
  %232 = vmatprep.subr.bf16.mxu0 0
  %233 = vmatpush1.bf16.msra.mxu0 0
  %234 = vmatprep.subr.bf16.mxu0 0
  %235 = vmatpush1.bf16.msra.mxu0 0
  %236 = vmatprep.subr.bf16.mxu0 0
  %237 = vmatpush1.bf16.msra.mxu0 0
  %238 = vmatprep.subr.bf16.mxu0 0
  %239 = vmatpush1.bf16.msra.mxu0 0
  %240 = vmatprep.subr.bf16.mxu0 0
  %241 = vmatpush1.bf16.msra.mxu0 0
  %242 = vmatprep.subr.bf16.mxu0 0
  %243 = vmatpush1.bf16.msra.mxu0 0
  %244 = vmatprep.subr.bf16.mxu0 0
  %245 = vmatpush1.bf16.msra.mxu0 0
  %246 = vmatprep.subr.bf16.mxu0 0
  %247 = vmatpush1.bf16.msra.mxu0 0
  %248 = vmatprep.subr.bf16.mxu0 0
  %249 = vmatpush1.bf16.msra.mxu0 0
  %250 = vmatprep.subr.bf16.mxu0 0
  %251 = vmatpush1.bf16.msra.mxu0 0
  %252 = vmatprep.subr.bf16.mxu0 0
  %253 = vmatpush1.bf16.msra.mxu0 0
  %254 = vmatprep.mubr.bf16.mxu0 0
  %255 = vmatmul.mubr.bf16.gmra.mrb[0].mxu0 %v180
  %v256 = vpop.f32.mrb[0].mxu0
  %v257 = vadd.f32 %v217, %v256
  %v258 = vpop.f32.mrb[0].mxu0
  %v259 = vpop.f32.mrb[0].mxu0
  %v260 = vpop.f32.mrb[0].mxu0
  %261 = vdwg.mxu0
  %v262 = vmax.f32 %v257, 0.0
  %263 = vst [vmem:[%s3] sm:$0xff] %v262
  // Predicated region
  $region14: #{inception_feature_extractor.16} parent=0 // pred_check
    _
  $region15: #{inception_feature_extractor.16} parent=0 // pred_check_branch
    %265 = sbr.rel (0) target = $region17
  $region16: #{inception_feature_extractor.16} parent=0 // pred_region
    _
  $region17: #{inception_feature_extractor.16} parent=0 // pred_fallthru
    _
  // Predicated region
  $region18: #{inception_feature_extractor.16} parent=0 // pred_check
    _
  $region19: #{inception_feature_extractor.16} parent=0 // pred_check_branch
    %267 = sbr.rel (0) target = $region21
  $region20: #{inception_feature_extractor.16} parent=0 // pred_region
    _
  $region21: #{inception_feature_extractor.16} parent=0 // pred_fallthru
    _

// kernel: inception_feature_extractor.17
$region0: #{inception_feature_extractor.17}
  #allocation0 [shape = 'u32[]', space=smem, size = 0x4, offset = 0x4, fixed_abs, tag = 'smem constant byte address 0x4 - core index']
  #allocation1 [shape = 'u32[144,128]{1,0:T(1,128)}', space=vmem, size = 0x12000, scoped, tag = 'internal scratch']
  %s0 = inlined_call_operand.vmem [shape: bf16[8,256], index: 0, kind: input, shape index: {}]
  %s1 = inlined_call_operand.vmem [shape: bf16[256,128], index: 1, kind: input, shape index: {}]
  %s2 = inlined_call_operand.vmem [shape: f32[1,128], index: 2, kind: input, shape index: {}]
  %s3 = inlined_call_operand.vmem [shape: f32[8,128], index: 3, kind: output, shape index: {}]
  %s4 = sld [smem:[#allocation0]]
  $region22: #{inception_feature_extractor.17} parent=0
    _
  %s6 = ssub.s32 1, %s4
  %s7 = scalar_select 0, %s6, %s4
  // Predicated region
  $region2: #{inception_feature_extractor.17} parent=0 // pred_check
    _
  $region3: #{inception_feature_extractor.17} parent=0 // pred_check_branch
    %9 = sbr.rel (0) target = $region5
  $region4: #{inception_feature_extractor.17} parent=0 // pred_region
    _
  $region5: #{inception_feature_extractor.17} parent=0 // pred_fallthru
    _
  // Predicated region
  $region6: #{inception_feature_extractor.17} parent=0 // pred_check
    _
  $region7: #{inception_feature_extractor.17} parent=0 // pred_check_branch
    %11 = sbr.rel (0) target = $region9
  $region8: #{inception_feature_extractor.17} parent=0 // pred_region
    _
  $region9: #{inception_feature_extractor.17} parent=0 // pred_fallthru
    _
  // Predicated region
  $region10: #{inception_feature_extractor.17} parent=0 // pred_check
    _
  $region11: #{inception_feature_extractor.17} parent=0 // pred_check_branch
    %13 = sbr.rel (0) target = $region13
  $region12: #{inception_feature_extractor.17} parent=0 // pred_region
    _
  $region13: #{inception_feature_extractor.17} parent=0 // pred_fallthru
    _
  %v15 = vld [vmem:[%s0] sm:$0xff]
  %v16 = vld [vmem:[%s1] sm:$0xf]
  %v17 = vld [vmem:[%s1 + $0x4] sm:$0xf]
  %v18 = vld [vmem:[%s1 + $0x8] sm:$0xf]
  %v19 = vld [vmem:[%s1 + $0xc] sm:$0xf]
  %v20 = vld [vmem:[%s1 + $0x10] sm:$0xf]
  %v21 = vld [vmem:[%s1 + $0x14] sm:$0xf]
  %v22 = vld [vmem:[%s1 + $0x18] sm:$0xf]
  %v23 = vld [vmem:[%s1 + $0x1c] sm:$0xf]
  %v24 = vld [vmem:[%s1 + $0x20] sm:$0xf]
  %v25 = vld [vmem:[%s1 + $0x24] sm:$0xf]
  %v26 = vld [vmem:[%s1 + $0x28] sm:$0xf]
  %v27 = vld [vmem:[%s1 + $0x2c] sm:$0xf]
  %v28 = vld [vmem:[%s1 + $0x30] sm:$0xf]
  %v29 = vld [vmem:[%s1 + $0x34] sm:$0xf]
  %v30 = vld [vmem:[%s1 + $0x38] sm:$0xf]
  %v31 = vld [vmem:[%s1 + $0x3c] sm:$0xf]
  %v32 = vld [vmem:[%s1 + $0x40] sm:$0xf]
  %v33 = vld [vmem:[%s1 + $0x44] sm:$0xf]
  %v34 = vld [vmem:[%s1 + $0x48] sm:$0xf]
  %v35 = vld [vmem:[%s1 + $0x4c] sm:$0xf]
  %v36 = vld [vmem:[%s1 + $0x50] sm:$0xf]
  %v37 = vld [vmem:[%s1 + $0x54] sm:$0xf]
  %v38 = vld [vmem:[%s1 + $0x58] sm:$0xf]
  %v39 = vld [vmem:[%s1 + $0x5c] sm:$0xf]
  %v40 = vld [vmem:[%s1 + $0x60] sm:$0xf]
  %v41 = vld [vmem:[%s1 + $0x64] sm:$0xf]
  %v42 = vld [vmem:[%s1 + $0x68] sm:$0xf]
  %v43 = vld [vmem:[%s1 + $0x6c] sm:$0xf]
  %v44 = vld [vmem:[%s1 + $0x70] sm:$0xf]
  %v45 = vld [vmem:[%s1 + $0x74] sm:$0xf]
  %v46 = vld [vmem:[%s1 + $0x78] sm:$0xf]
  %v47 = vld [vmem:[%s1 + $0x7c] sm:$0xf]
  %v48 = vld [vmem:[%s2] sm:$0x1]
  %v50 = vlaneseq
  %v51 = vshrl.u32 %v50, 7
  %v52 = vsub.s32 0, %v51
  %v53 = vrot.slane %v48, %v52
  %v56 = vunpack.c.l.b16 %v15
  %v57 = vunpack.c.h.b16 %v15
  %v58 = vpack.c.b16 %v56, %v56
  %v59 = vpack.c.b16 %v57, %v57
  %v94 = vunpack.c.l.b16 %v16
  %v95 = vunpack.c.l.b16 %v17
  %v96 = vunpack.c.l.b16 %v18
  %v97 = vunpack.c.l.b16 %v19
  %v98 = vunpack.c.l.b16 %v20
  %v99 = vunpack.c.l.b16 %v21
  %v100 = vunpack.c.l.b16 %v22
  %v101 = vunpack.c.l.b16 %v23
  %v102 = vunpack.c.l.b16 %v24
  %v103 = vunpack.c.l.b16 %v25
  %v104 = vunpack.c.l.b16 %v26
  %v105 = vunpack.c.l.b16 %v27
  %v106 = vunpack.c.l.b16 %v28
  %v107 = vunpack.c.l.b16 %v29
  %v108 = vunpack.c.l.b16 %v30
  %v109 = vunpack.c.l.b16 %v31
  %v110 = vunpack.c.l.b16 %v32
  %v111 = vunpack.c.l.b16 %v33
  %v112 = vunpack.c.l.b16 %v34
  %v113 = vunpack.c.l.b16 %v35
  %v114 = vunpack.c.l.b16 %v36
  %v115 = vunpack.c.l.b16 %v37
  %v116 = vunpack.c.l.b16 %v38
  %v117 = vunpack.c.l.b16 %v39
  %v118 = vunpack.c.l.b16 %v40
  %v119 = vunpack.c.l.b16 %v41
  %v120 = vunpack.c.l.b16 %v42
  %v121 = vunpack.c.l.b16 %v43
  %v122 = vunpack.c.l.b16 %v44
  %v123 = vunpack.c.l.b16 %v45
  %v124 = vunpack.c.l.b16 %v46
  %v125 = vunpack.c.l.b16 %v47
  %v126 = vpack.c.b16 %v95, %v94
  %v127 = vpack.c.b16 %v97, %v96
  %v128 = vpack.c.b16 %v99, %v98
  %v129 = vpack.c.b16 %v101, %v100
  %v130 = vpack.c.b16 %v103, %v102
  %v131 = vpack.c.b16 %v105, %v104
  %v132 = vpack.c.b16 %v107, %v106
  %v133 = vpack.c.b16 %v109, %v108
  %v134 = vpack.c.b16 %v111, %v110
  %v135 = vpack.c.b16 %v113, %v112
  %v136 = vpack.c.b16 %v115, %v114
  %v137 = vpack.c.b16 %v117, %v116
  %v138 = vpack.c.b16 %v119, %v118
  %v139 = vpack.c.b16 %v121, %v120
  %v140 = vpack.c.b16 %v123, %v122
  %v141 = vpack.c.b16 %v125, %v124
  %158 = vmatprep.subr.bf16.mxu0 0
  %159 = vmatpush1.bf16.msra.mxu0 %v126
  %160 = vmatprep.subr.bf16.mxu0 0
  %161 = vmatpush1.bf16.msra.mxu0 %v127
  %162 = vmatprep.subr.bf16.mxu0 0
  %163 = vmatpush1.bf16.msra.mxu0 %v128
  %164 = vmatprep.subr.bf16.mxu0 0
  %165 = vmatpush1.bf16.msra.mxu0 %v129
  %166 = vmatprep.subr.bf16.mxu0 0
  %167 = vmatpush1.bf16.msra.mxu0 %v130
  %168 = vmatprep.subr.bf16.mxu0 0
  %169 = vmatpush1.bf16.msra.mxu0 %v131
  %170 = vmatprep.subr.bf16.mxu0 0
  %171 = vmatpush1.bf16.msra.mxu0 %v132
  %172 = vmatprep.subr.bf16.mxu0 0
  %173 = vmatpush1.bf16.msra.mxu0 %v133
  %174 = vmatprep.subr.bf16.mxu0 0
  %175 = vmatpush1.bf16.msra.mxu0 %v134
  %176 = vmatprep.subr.bf16.mxu0 0
  %177 = vmatpush1.bf16.msra.mxu0 %v135
  %178 = vmatprep.subr.bf16.mxu0 0
  %179 = vmatpush1.bf16.msra.mxu0 %v136
  %180 = vmatprep.subr.bf16.mxu0 0
  %181 = vmatpush1.bf16.msra.mxu0 %v137
  %182 = vmatprep.subr.bf16.mxu0 0
  %183 = vmatpush1.bf16.msra.mxu0 %v138
  %184 = vmatprep.subr.bf16.mxu0 0
  %185 = vmatpush1.bf16.msra.mxu0 %v139
  %186 = vmatprep.subr.bf16.mxu0 0
  %187 = vmatpush1.bf16.msra.mxu0 %v140
  %188 = vmatprep.subr.bf16.mxu0 0
  %189 = vmatpush1.bf16.msra.mxu0 %v141
  %190 = vmatprep.mubr.bf16.mxu0 %v59
  %191 = vmatmul.mubr.bf16.gmra.mrb[0].mxu0 %v58
  %v192 = vpop.f32.mrb[0].mxu0
  %v193 = vadd.f32 %v53, %v192
  %v194 = vpop.f32.mrb[0].mxu0
  %v195 = vpop.f32.mrb[0].mxu0
  %v196 = vpop.f32.mrb[0].mxu0
  %197 = vdwg.mxu0
  %v198 = vmax.f32 %v193, 0.0
  %199 = vst [vmem:[%s3] sm:$0xff] %v198
  // Predicated region
  $region14: #{inception_feature_extractor.17} parent=0 // pred_check
    _
  $region15: #{inception_feature_extractor.17} parent=0 // pred_check_branch
    %201 = sbr.rel (0) target = $region17
  $region16: #{inception_feature_extractor.17} parent=0 // pred_region
    _
  $region17: #{inception_feature_extractor.17} parent=0 // pred_fallthru
    _
  // Predicated region
  $region18: #{inception_feature_extractor.17} parent=0 // pred_check
    _
  $region19: #{inception_feature_extractor.17} parent=0 // pred_check_branch
    %203 = sbr.rel (0) target = $region21
  $region20: #{inception_feature_extractor.17} parent=0 // pred_region
    _
  $region21: #{inception_feature_extractor.17} parent=0 // pred_fallthru
    _

// kernel: inception_feature_extractor.19
$region0: #{inception_feature_extractor.19}
  #allocation0 [shape = 'u32[]', space=smem, size = 0x4, offset = 0x4, fixed_abs, tag = 'smem constant byte address 0x4 - core index']
  #allocation1 [shape = 'u32[144,128]{1,0:T(1,128)}', space=vmem, size = 0x12000, scoped, tag = 'internal scratch']
  %s0 = inlined_call_operand.vmem [shape: f32[8,4,128], index: 0, kind: input, shape index: {}]
  %s1 = inlined_call_operand.vmem [shape: f32[8,128], index: 1, kind: output, shape index: {}]
  %s2 = sld [smem:[#allocation0]]
  $region14: #{inception_feature_extractor.19} parent=0
    _
  %s4 = ssub.s32 1, %s2
  %s5 = scalar_select 0, %s4, %s2
  // Predicated region
  $region2: #{inception_feature_extractor.19} parent=0 // pred_check
    _
  $region3: #{inception_feature_extractor.19} parent=0 // pred_check_branch
    %7 = sbr.rel (0) target = $region5
  $region4: #{inception_feature_extractor.19} parent=0 // pred_region
    _
  $region5: #{inception_feature_extractor.19} parent=0 // pred_fallthru
    _
  %v8 = vld [vmem:[%s0] sm:$0xf]
  %v9 = vld [vmem:[%s0 + $0x4] sm:$0xf]
  %v10 = vld [vmem:[%s0 + $0x8] sm:$0xf]
  %v11 = vld [vmem:[%s0 + $0xc] sm:$0xf]
  %v12 = vld [vmem:[%s0 + $0x10] sm:$0xf]
  %v13 = vld [vmem:[%s0 + $0x14] sm:$0xf]
  %v14 = vld [vmem:[%s0 + $0x18] sm:$0xf]
  %v15 = vld [vmem:[%s0 + $0x1c] sm:$0xf]
  %v24 = vrot.slane %v8, 1
  %v25 = vrot.slane %v9, 1
  %v26 = vrot.slane %v10, 1
  %v27 = vrot.slane %v11, 1
  %v28 = vrot.slane %v12, 1
  %v29 = vrot.slane %v13, 1
  %v30 = vrot.slane %v14, 1
  %v31 = vrot.slane %v15, 1
  %v40 = vadd.f32 %v8, %v24
  %v41 = vadd.f32 %v9, %v25
  %v42 = vadd.f32 %v10, %v26
  %v43 = vadd.f32 %v11, %v27
  %v44 = vadd.f32 %v12, %v28
  %v45 = vadd.f32 %v13, %v29
  %v46 = vadd.f32 %v14, %v30
  %v47 = vadd.f32 %v15, %v31
  %v48 = vrot.slane %v8, 2
  %v49 = vrot.slane %v9, 2
  %v50 = vrot.slane %v10, 2
  %v51 = vrot.slane %v11, 2
  %v52 = vrot.slane %v12, 2
  %v53 = vrot.slane %v13, 2
  %v54 = vrot.slane %v14, 2
  %v55 = vrot.slane %v15, 2
  %v64 = vadd.f32 %v40, %v48
  %v65 = vadd.f32 %v41, %v49
  %v66 = vadd.f32 %v42, %v50
  %v67 = vadd.f32 %v43, %v51
  %v68 = vadd.f32 %v44, %v52
  %v69 = vadd.f32 %v45, %v53
  %v70 = vadd.f32 %v46, %v54
  %v71 = vadd.f32 %v47, %v55
  %v72 = vrot.slane %v8, 3
  %v73 = vrot.slane %v9, 3
  %v74 = vrot.slane %v10, 3
  %v75 = vrot.slane %v11, 3
  %v76 = vrot.slane %v12, 3
  %v77 = vrot.slane %v13, 3
  %v78 = vrot.slane %v14, 3
  %v79 = vrot.slane %v15, 3
  %v88 = vadd.f32 %v64, %v72
  %v89 = vadd.f32 %v65, %v73
  %v90 = vadd.f32 %v66, %v74
  %v91 = vadd.f32 %v67, %v75
  %v92 = vadd.f32 %v68, %v76
  %v93 = vadd.f32 %v69, %v77
  %v94 = vadd.f32 %v70, %v78
  %v95 = vadd.f32 %v71, %v79
  %v96 = vmul.f32 %v88, 0.25
  %v97 = vmul.f32 %v89, 0.25
  %v98 = vmul.f32 %v90, 0.25
  %v99 = vmul.f32 %v91, 0.25
  %v100 = vmul.f32 %v92, 0.25
  %v101 = vmul.f32 %v93, 0.25
  %v102 = vmul.f32 %v94, 0.25
  %v103 = vmul.f32 %v95, 0.25
  %v112 = vrot.slane %v97, 7
  %vm113 = vcmask 1041409
  %v114 = vsel %vm113, %v112, %v96
  %v115 = vrot.slane %v98, 6
  %vm116 = vcmask 1042434
  %v117 = vsel %vm116, %v115, %v114
  %v118 = vrot.slane %v99, 5
  %vm119 = vcmask 1043459
  %v120 = vsel %vm119, %v118, %v117
  %v121 = vrot.slane %v100, 4
  %vm122 = vcmask 1044484
  %v123 = vsel %vm122, %v121, %v120
  %v124 = vrot.slane %v101, 3
  %vm125 = vcmask 1045509
  %v126 = vsel %vm125, %v124, %v123
  %v127 = vrot.slane %v102, 2
  %vm128 = vcmask 1046534
  %v129 = vsel %vm128, %v127, %v126
  %v130 = vrot.slane %v103, 1
  %vm131 = vcmask 1047559
  %v132 = vsel %vm131, %v130, %v129
  %134 = vst [vmem:[%s1] sm:$0xff] %v132
  // Predicated region
  $region6: #{inception_feature_extractor.19} parent=0 // pred_check
    _
  $region7: #{inception_feature_extractor.19} parent=0 // pred_check_branch
    %136 = sbr.rel (0) target = $region9
  $region8: #{inception_feature_extractor.19} parent=0 // pred_region
    _
  $region9: #{inception_feature_extractor.19} parent=0 // pred_fallthru
    _
  // Predicated region
  $region10: #{inception_feature_extractor.19} parent=0 // pred_check
    _
  $region11: #{inception_feature_extractor.19} parent=0 // pred_check_branch
    %138 = sbr.rel (0) target = $region13
  $region12: #{inception_feature_extractor.19} parent=0 // pred_region
    _
  $region13: #{inception_feature_extractor.19} parent=0 // pred_fallthru
    _

</llo_original>
